<compile_context>
chip_gen: v5e
topology: v5e:2x2
jax: 0.10.0
libtpu: 0.0.40
codegen_flags: <defaults>
</compile_context>

<pallas_src>
import math

import jax
import jax.numpy as jnp
from jax.experimental import pallas as pl
from jax.experimental.pallas import tpu as pltpu

EPS = 1e-12                       # torch F.normalize default eps
EDGE_DIM = 45
EDGE_PAD = 48                     # edge-feature width padded to a sublane multiple
P = 256                           # padded channel width (max cin/cout over layers)
QKV_W = 4 * P                     # fused [Wq|Wk|Wv|Wskip] output width
LAYER_DIMS = ((30, 128), (128, 256), (256, 64), (64, 29))
NEG_INF = -1e30


# --------------------------------------------------------------------------- #
# Pallas kernel: one TransformerConv layer per grid step (PyG semantics, heads=1)
# --------------------------------------------------------------------------- #
def _abode_layer_kernel(x0_ref, gsrc_ref, gdstT_ref, feat_ref,
                        wall_ref, ball_ref, weT_ref, out_ref, h_ref):
    f32 = jnp.float32
    l = pl.program_id(0)

    # Layer 0: seed the carried activations with the (padded) [t | data] features.
    @pl.when(l == 0)
    def _():
        h_ref[...] = x0_ref[...]

    h = h_ref[...]                                  # [N, P]  carried activations
    wall = wall_ref[0]                              # [P, 4P] = [Wq|Wk|Wv|Wskip]^T (padded)
    ball = ball_ref[0]                              # [1, 4P]

    # One fused projection matmul for q / k / v / skip (all slices 128-lane aligned).
    qkvs = jnp.dot(h, wall, preferred_element_type=f32) + ball       # [N, 4P]
    q = qkvs[:, 0:P]                                # already scaled by 1/sqrt(cout)
    skip = qkvs[:, 3 * P:4 * P]

    # Edge projection (no bias, as in PyG lin_edge).
    e = jnp.dot(feat_ref[...], weT_ref[0], preferred_element_type=f32)  # [Ep, P]

    # Gather k and v for edge sources with a single one-hot matmul.
    kv = jnp.dot(gsrc_ref[...], qkvs[:, P:3 * P], preferred_element_type=f32)  # [Ep, 2P]
    k_j = kv[:, 0:P] + e
    v_j = kv[:, P:2 * P] + e

    # Transposed logits: s[n, e] = q[n] . k_j[e]   -> lane-dense [N, Ep] layout.
    s = jax.lax.dot_general(q, k_j, (((1,), (1,)), ((), ())),
                            preferred_element_type=f32)               # [N, Ep]
    gdstT = gdstT_ref[...]                                            # [N, Ep] one-hot(dst)^T
    masked = jnp.where(gdstT > 0, s, NEG_INF)

    # Segment softmax over destination nodes (lane-axis reductions).
    m = jnp.max(masked, axis=1, keepdims=True)                        # [N, 1]
    att = gdstT * jnp.exp(masked - m)                                 # [N, Ep]
    z = jnp.sum(att, axis=1, keepdims=True)                           # [N, 1]
    # NOTE: destinations with zero in-edges fall through to h = skip (z clamped).
    att_n = att * pl.reciprocal(jnp.maximum(z, 1e-30), approx=False)

    # Scatter-add over destinations as a direct MXU matmul.
    agg = jnp.dot(att_n, v_j, preferred_element_type=f32)             # [N, P]
    h_new = agg + skip

    @pl.when(l == 0)
    def _():
        h_ref[...] = jnp.maximum(h_new, 0.0)                          # ReLU

    @pl.when(jnp.logical_or(l == 1, l == 2))
    def _():
        # sigmoid via single EUP tanh: sigmoid(x) = 0.5*(tanh(x/2)+1)
        h_ref[...] = 0.5 * (jnp.tanh(0.5 * h_new) + 1.0)

    @pl.when(l == 3)
    def _():
        h_ref[...] = h_new                                            # no activation

    out_ref[...] = h_ref[...]


# --------------------------------------------------------------------------- #
# JAX glue: backbone frames, edge features, one-hot matrices, weight packing
# --------------------------------------------------------------------------- #
def _l2_normalize(x, eps=EPS):
    n = jnp.sqrt(jnp.sum(x * x, axis=-1, keepdims=True))
    return x / jnp.maximum(n, eps)


def get_orientations(node_coord):
    # node_coord: [N, 9] -> per-node row-major 3x3 backbone frame flattened to [N, 9]
    n = node_coord.shape[0]
    x = node_coord.reshape(3 * n, 3)
    dx = x[1:] - x[:-1]
    u = _l2_normalize(dx)
    u2, u1 = u[:-2], u[1:-1]
    n2 = _l2_normalize(jnp.cross(u2, u1))
    o1 = _l2_normalize(u2 - u1)
    o = jnp.stack([o1, n2, jnp.cross(o1, n2)], axis=1).reshape(3 * n - 3, 9)
    o = jnp.pad(o, ((1, 2), (0, 0)))
    return o.reshape(n, 3, 9)[:, 1, :]


def build_edge_features(data, edge_index, amino_index):
    """Faithful port of the reference edge-feature pipeline -> [E, 45]."""
    node_label = data[:, :20]
    node_coord = data[:, 20:29]
    src, dst = edge_index[0], edge_index[1]

    coords3 = node_coord.reshape(-1, 3, 3)
    dvec = coords3[src] - coords3[dst]                          # [E, 3, 3]
    dnorm = jnp.sqrt(jnp.sum(dvec * dvec, axis=2))              # [E, 3]
    rbf = jnp.exp(-dnorm)                                       # [E, 3]
    rvec = dvec / jnp.maximum(dnorm[..., None], EPS)            # unit rows, [E,3,3]

    lab_d = node_label[src] - node_label[dst]                   # [E, 20]
    a = amino_index.reshape(-1, 1).astype(jnp.float32)
    a_d = a[src] - a[dst]                                       # [E, 1]

    O = get_orientations(node_coord)                            # [N, 9]
    Os = O[src].reshape(-1, 3, 3)
    Od = O[dst].reshape(-1, 3, 3)
    orient = jnp.einsum('eca,ecb->eab', Os, Od).reshape(-1, 9)  # O_src^T @ O_dst

    # F.normalize over a size-1 dim reduces to elementwise sign (faithful to the
    # reference's [E,3,1] view of r_ij_vector[:, 3:6]).
    rv1 = rvec[:, 1, :]
    vm = rv1 / jnp.maximum(jnp.abs(rv1), EPS)
    ovec = jnp.einsum('eca,ec->ea', Os, vm)                     # O_src^T @ sign(rv1)

    return jnp.concatenate(
        [a_d, lab_d, rbf, rvec.reshape(-1, 9), orient, ovec], axis=1)   # [E, 45]


def pack_params(params):
    """Stack per-layer weights into lane-padded arrays; fold 1/sqrt(cout) into Wq/bq."""
    walls, balls, wes = [], [], []
    for (cin, cout), p in zip(LAYER_DIMS, params):
        scale = 1.0 / math.sqrt(cout)
        wall = jnp.zeros((P, QKV_W), jnp.float32)
        wall = wall.at[:cin, 0:cout].set(p["wqT"] * scale)
        wall = wall.at[:cin, P:P + cout].set(p["wkT"])
        wall = wall.at[:cin, 2 * P:2 * P + cout].set(p["wvT"])
        wall = wall.at[:cin, 3 * P:3 * P + cout].set(p["wsT"])
        ball = jnp.zeros((1, QKV_W), jnp.float32)
        ball = ball.at[:, 0:cout].set(p["bq"] * scale)
        ball = ball.at[:, P:P + cout].set(p["bk"])
        ball = ball.at[:, 2 * P:2 * P + cout].set(p["bv"])
        ball = ball.at[:, 3 * P:3 * P + cout].set(p["bs"])
        we = jnp.zeros((EDGE_PAD, P), jnp.float32).at[:EDGE_DIM, :cout].set(p["weT"])
        walls.append(wall)
        balls.append(ball)
        wes.append(we)
    return jnp.stack(walls), jnp.stack(balls), jnp.stack(wes)


def _round_up(x, m):
    return ((x + m - 1) // m) * m


@jax.jit
def abode_uncond_forward(t, data, edge_index, amino_index,
                         wall_stack, ball_stack, weT_stack):
    n = data.shape[0]
    num_edges = edge_index.shape[1]
    e_pad = _round_up(num_edges, 8)
    src, dst = edge_index[0], edge_index[1]

    # Edge features (padded lane-dense [Ep, 48]).
    feat = build_edge_features(data, edge_index, amino_index)
    feat_pad = jnp.zeros((e_pad, EDGE_PAD), jnp.float32)
    feat_pad = feat_pad.at[:num_edges, :EDGE_DIM].set(feat)

    # One-hot gather (src) and transposed scatter/mask (dst) matrices.
    gsrc = jax.nn.one_hot(src, n, dtype=jnp.float32)             # [E, N]
    gsrc = jnp.pad(gsrc, ((0, e_pad - num_edges), (0, 0)))       # [Ep, N]
    gdstT = jax.nn.one_hot(dst, n, dtype=jnp.float32).T          # [N, E]
    gdstT = jnp.pad(gdstT, ((0, 0), (0, e_pad - num_edges)))     # [N, Ep]

    # Initial node features [t | data], zero-padded to P lanes.
    tt = jnp.full((n, 1), t, jnp.float32)
    x0 = jnp.concatenate([tt, data.astype(jnp.float32)], axis=1)   # [N, 30]
    x0_pad = jnp.zeros((n, P), jnp.float32).at[:, :LAYER_DIMS[0][0]].set(x0)

    num_layers = len(LAYER_DIMS)
    out = pl.pallas_call(
        _abode_layer_kernel,
        out_shape=jax.ShapeDtypeStruct((n, P), jnp.float32),
        grid_spec=pltpu.PrefetchScalarGridSpec(
            num_scalar_prefetch=0,
            grid=(num_layers,),
            in_specs=[
                pl.BlockSpec((n, P), lambda l: (0, 0)),            # x0
                pl.BlockSpec((e_pad, n), lambda l: (0, 0)),        # gsrc
                pl.BlockSpec((n, e_pad), lambda l: (0, 0)),        # gdst^T
                pl.BlockSpec((e_pad, EDGE_PAD), lambda l: (0, 0)), # edge features
                pl.BlockSpec((1, P, QKV_W), lambda l: (l, 0, 0)),  # per-layer W
                pl.BlockSpec((1, 1, QKV_W), lambda l: (l, 0, 0)),  # per-layer b
                pl.BlockSpec((1, EDGE_PAD, P), lambda l: (l, 0, 0)),  # per-layer We
            ],
            out_specs=pl.BlockSpec((n, P), lambda l: (0, 0)),
            scratch_shapes=[pltpu.VMEM((n, P), jnp.float32)],      # carried h
        ),
        compiler_params=pltpu.CompilerParams(
            dimension_semantics=("arbitrary",)),
    )(x0_pad, gsrc, gdstT, feat_pad, wall_stack, ball_stack, weT_stack)

    return out[:, :LAYER_DIMS[-1][1]]


# --------------------------------------------------------------------------- #
# Deterministic parameter init (synthetic weights; no checkpoint load)
# --------------------------------------------------------------------------- #
def init_params(key):
    params = []
    for cin, cout in LAYER_DIMS:
        key, *ks = jax.random.split(key, 10)

        def u(k, fan_in, shape):
            bound = 1.0 / math.sqrt(fan_in)
            return jax.random.uniform(k, shape, jnp.float32, -bound, bound)

        params.append(dict(
            wqT=u(ks[0], cin, (cin, cout)), bq=u(ks[1], cin, (1, cout)),
            wkT=u(ks[2], cin, (cin, cout)), bk=u(ks[3], cin, (1, cout)),
            wvT=u(ks[4], cin, (cin, cout)), bv=u(ks[5], cin, (1, cout)),
            weT=u(ks[6], EDGE_DIM, (EDGE_DIM, cout)),
            wsT=u(ks[7], cin, (cin, cout)), bs=u(ks[8], cin, (1, cout)),
        ))
    return params


if __name__ == "__main__":
    key = jax.random.PRNGKey(0)
    k_data, k_param = jax.random.split(key)

    N = 16                                    # number of graph nodes (residues)
    data = jax.random.normal(k_data, (N, 29), jnp.float32)  # [:,:20] labels, [:,20:29] coords

    # deterministic chain-neighbourhood edge index [2, E]
    src_list, dst_list = [], []
    for i in range(N):
        for d in (-2, -1, 1, 2):
            j = i + d
            if 0 <= j < N:
                src_list.append(j)
                dst_list.append(i)
    edge_index = jnp.array([src_list, dst_list], dtype=jnp.int32)   # E = 58
    amino_index = jnp.arange(N, dtype=jnp.float32)

    params = init_params(k_param)
    wall_stack, ball_stack, weT_stack = pack_params(params)
    t = 0.5

    out = abode_uncond_forward(t, data, edge_index, amino_index,
                               wall_stack, ball_stack, weT_stack)
    out = jax.block_until_ready(out)
    assert out.shape == (N, 29) and out.dtype == jnp.float32
    assert bool(jnp.all(jnp.isfinite(out)))
    print("KERNEL_OK")
</pallas_src>

<mosaic_0001>
module attributes {stable_mosaic.version = 11 : i64} {
  func.func @_abode_layer_kernel(%arg0: i32, %arg1: memref<16x256xf32, #tpu.memory_space<vmem>>, %arg2: memref<64x16xf32, #tpu.memory_space<vmem>>, %arg3: memref<16x64xf32, #tpu.memory_space<vmem>>, %arg4: memref<64x48xf32, #tpu.memory_space<vmem>>, %arg5: memref<1x256x1024xf32, #tpu.memory_space<vmem>>, %arg6: memref<1x1x1024xf32, #tpu.memory_space<vmem>>, %arg7: memref<1x48x256xf32, #tpu.memory_space<vmem>>, %arg8: memref<16x256xf32, #tpu.memory_space<vmem>>, %arg9: memref<16x256xf32, #tpu.memory_space<vmem>>) attributes {dimension_semantics = [#tpu.dimension_semantics<arbitrary>], iteration_bounds = array<i64: 4>, scalar_prefetch = 0 : i64, scratch_operands = 1 : i64, tpu.core_type = #tpu.core_type<tc>, window_params = [{pipeline_mode = #tpu.pipeline_mode<synchronous>, transform_indices = @transform_0, window_bounds = array<i64: 16, 256>}, {pipeline_mode = #tpu.pipeline_mode<synchronous>, transform_indices = @transform_1, window_bounds = array<i64: 64, 16>}, {pipeline_mode = #tpu.pipeline_mode<synchronous>, transform_indices = @transform_2, window_bounds = array<i64: 16, 64>}, {pipeline_mode = #tpu.pipeline_mode<synchronous>, transform_indices = @transform_3, window_bounds = array<i64: 64, 48>}, {transform_indices = @transform_4, window_bounds = array<i64: 1, 256, 1024>}, {transform_indices = @transform_5, window_bounds = array<i64: 1, 1, 1024>}, {transform_indices = @transform_6, window_bounds = array<i64: 1, 48, 256>}, {pipeline_mode = #tpu.pipeline_mode<synchronous>, transform_indices = @transform_7, window_bounds = array<i64: 16, 256>}]} {
    %c0_i32 = arith.constant 0 : i32
    %0 = arith.cmpi eq, %arg0, %c0_i32 : i32
    %1 = arith.extui %0 : i1 to i32
    %c0_i32_0 = arith.constant 0 : i32
    %2 = arith.cmpi ne, %1, %c0_i32_0 : i32
    scf.if %2 {
      %c0_34 = arith.constant 0 : index
      %c0_35 = arith.constant 0 : index
      %58 = vector.load %arg1[%c0_34, %c0_35] : memref<16x256xf32, #tpu.memory_space<vmem>>, vector<16x256xf32>
      %c0_36 = arith.constant 0 : index
      %c0_37 = arith.constant 0 : index
      %59 = vector.load %arg9[%c0_36, %c0_37] : memref<16x256xf32, #tpu.memory_space<vmem>>, vector<16x256xf32>
      tpu.vector_store %arg9[%c0_36, %c0_37], %58 {strides = array<i32>} : memref<16x256xf32, #tpu.memory_space<vmem>>, vector<16x256xf32>,
    } else {
    }
    %c0 = arith.constant 0 : index
    %c0_1 = arith.constant 0 : index
    %3 = vector.load %arg9[%c0, %c0_1] : memref<16x256xf32, #tpu.memory_space<vmem>>, vector<16x256xf32>
    %c0_2 = arith.constant 0 : index
    %c0_3 = arith.constant 0 : index
    %c0_4 = arith.constant 0 : index
    %4 = vector.load %arg5[%c0_2, %c0_3, %c0_4] : memref<1x256x1024xf32, #tpu.memory_space<vmem>>, vector<1x256x1024xf32>
    %5 = vector.shape_cast %4 : vector<1x256x1024xf32> to vector<256x1024xf32>
    %c0_5 = arith.constant 0 : index
    %c0_6 = arith.constant 0 : index
    %c0_7 = arith.constant 0 : index
    %6 = vector.load %arg6[%c0_5, %c0_6, %c0_7] : memref<1x1x1024xf32, #tpu.memory_space<vmem>>, vector<1x1x1024xf32>
    %7 = vector.shape_cast %6 : vector<1x1x1024xf32> to vector<1x1024xf32>
    %cst = arith.constant dense<0.000000e+00> : vector<16x1024xf32>
    %8 = tpu.matmul %3, %5, %cst {dimension_numbers = #tpu.dot_dimension_numbers<[1], [0], [0], [1], [0, 0, 1, 1], [], []>} : vector<16x256xf32>, vector<256x1024xf32>, vector<16x1024xf32> -> vector<16x1024xf32>
    %9 = vector.broadcast %7 : vector<1x1024xf32> to vector<16x1024xf32>
    %10 = arith.addf %8, %9 : vector<16x1024xf32>
    %11 = vector.extract_strided_slice %10 {offsets = [0, 0], sizes = [16, 256], strides = [1, 1]} : vector<16x1024xf32> to vector<16x256xf32>
    %12 = vector.extract_strided_slice %10 {offsets = [0, 768], sizes = [16, 256], strides = [1, 1]} : vector<16x1024xf32> to vector<16x256xf32>
    %c0_8 = arith.constant 0 : index
    %c0_9 = arith.constant 0 : index
    %13 = vector.load %arg4[%c0_8, %c0_9] : memref<64x48xf32, #tpu.memory_space<vmem>>, vector<64x48xf32>
    %c0_10 = arith.constant 0 : index
    %c0_11 = arith.constant 0 : index
    %c0_12 = arith.constant 0 : index
    %14 = vector.load %arg7[%c0_10, %c0_11, %c0_12] : memref<1x48x256xf32, #tpu.memory_space<vmem>>, vector<1x48x256xf32>
    %15 = vector.shape_cast %14 : vector<1x48x256xf32> to vector<48x256xf32>
    %cst_13 = arith.constant dense<0.000000e+00> : vector<64x256xf32>
    %16 = tpu.matmul %13, %15, %cst_13 {dimension_numbers = #tpu.dot_dimension_numbers<[1], [0], [0], [1], [0, 0, 1, 1], [], []>} : vector<64x48xf32>, vector<48x256xf32>, vector<64x256xf32> -> vector<64x256xf32>
    %c0_14 = arith.constant 0 : index
    %c0_15 = arith.constant 0 : index
    %17 = vector.load %arg2[%c0_14, %c0_15] : memref<64x16xf32, #tpu.memory_space<vmem>>, vector<64x16xf32>
    %18 = vector.extract_strided_slice %10 {offsets = [0, 256], sizes = [16, 512], strides = [1, 1]} : vector<16x1024xf32> to vector<16x512xf32>
    %cst_16 = arith.constant dense<0.000000e+00> : vector<64x512xf32>
    %19 = tpu.matmul %17, %18, %cst_16 {dimension_numbers = #tpu.dot_dimension_numbers<[1], [0], [0], [1], [0, 0, 1, 1], [], []>} : vector<64x16xf32>, vector<16x512xf32>, vector<64x512xf32> -> vector<64x512xf32>
    %20 = vector.extract_strided_slice %19 {offsets = [0, 0], sizes = [64, 256], strides = [1, 1]} : vector<64x512xf32> to vector<64x256xf32>
    %21 = arith.addf %20, %16 : vector<64x256xf32>
    %22 = vector.extract_strided_slice %19 {offsets = [0, 256], sizes = [64, 256], strides = [1, 1]} : vector<64x512xf32> to vector<64x256xf32>
    %23 = arith.addf %22, %16 : vector<64x256xf32>
    %cst_17 = arith.constant dense<0.000000e+00> : vector<16x64xf32>
    %24 = tpu.matmul %11, %21, %cst_17 {dimension_numbers = #tpu.dot_dimension_numbers<[1], [1], [0], [0], [0, 0, 1, 0], [], []>} : vector<16x256xf32>, vector<64x256xf32>, vector<16x64xf32> -> vector<16x64xf32>
    %c0_18 = arith.constant 0 : index
    %c0_19 = arith.constant 0 : index
    %25 = vector.load %arg3[%c0_18, %c0_19] : memref<16x64xf32, #tpu.memory_space<vmem>>, vector<16x64xf32>
    %cst_20 = arith.constant 0.000000e+00 : f32
    %26 = vector.broadcast %cst_20 : f32 to vector<16x64xf32>
    %27 = arith.cmpf ogt, %25, %26 : vector<16x64xf32>
    %cst_21 = arith.constant -1.000000e+30 : f32
    %28 = vector.broadcast %cst_21 : f32 to vector<16x64xf32>
    %29 = arith.select %27, %24, %28 : vector<16x64xi1>, vector<16x64xf32>
    %cst_22 = arith.constant dense<0xFF800000> : vector<16xf32>
    %30 = vector.multi_reduction <maximumf>, %29, %cst_22 [1] : vector<16x64xf32> to vector<16xf32>
    %31 = vector.shape_cast %30 : vector<16xf32> to vector<16x1xf32>
    %32 = vector.broadcast %31 : vector<16x1xf32> to vector<16x64xf32>
    %33 = arith.subf %29, %32 : vector<16x64xf32>
    %34 = math.exp %33 : vector<16x64xf32>
    %35 = arith.mulf %25, %34 : vector<16x64xf32>
    %cst_23 = arith.constant dense<0.000000e+00> : vector<16xf32>
    %36 = vector.multi_reduction <add>, %35, %cst_23 [1] : vector<16x64xf32> to vector<16xf32>
    %37 = vector.shape_cast %36 : vector<16xf32> to vector<16x1xf32>
    %cst_24 = arith.constant 1.000000e-30 : f32
    %38 = vector.broadcast %cst_24 : f32 to vector<16x1xf32>
    %39 = arith.maximumf %37, %38 : vector<16x1xf32>
    %40 = tpu.reciprocal %39 : vector<16x1xf32> -> vector<16x1xf32>
    %41 = vector.broadcast %40 : vector<16x1xf32> to vector<16x64xf32>
    %42 = arith.mulf %35, %41 : vector<16x64xf32>
    %cst_25 = arith.constant dense<0.000000e+00> : vector<16x256xf32>
    %43 = tpu.matmul %42, %23, %cst_25 {dimension_numbers = #tpu.dot_dimension_numbers<[1], [0], [0], [1], [0, 0, 1, 1], [], []>} : vector<16x64xf32>, vector<64x256xf32>, vector<16x256xf32> -> vector<16x256xf32>
    %44 = arith.addf %43, %12 : vector<16x256xf32>
    %c0_i32_26 = arith.constant 0 : i32
    %45 = arith.cmpi eq, %arg0, %c0_i32_26 : i32
    %46 = arith.extui %45 : i1 to i32
    %c0_i32_27 = arith.constant 0 : i32
    %47 = arith.cmpi ne, %46, %c0_i32_27 : i32
    scf.if %47 {
      %cst_34 = arith.constant 0.000000e+00 : f32
      %58 = vector.broadcast %cst_34 : f32 to vector<16x256xf32>
      %59 = arith.maximumf %44, %58 : vector<16x256xf32>
      %c0_35 = arith.constant 0 : index
      %c0_36 = arith.constant 0 : index
      %60 = vector.load %arg9[%c0_35, %c0_36] : memref<16x256xf32, #tpu.memory_space<vmem>>, vector<16x256xf32>
      tpu.vector_store %arg9[%c0_35, %c0_36], %59 {strides = array<i32>} : memref<16x256xf32, #tpu.memory_space<vmem>>, vector<16x256xf32>,
    } else {
    }
    %c1_i32 = arith.constant 1 : i32
    %48 = arith.cmpi eq, %arg0, %c1_i32 : i32
    %c2_i32 = arith.constant 2 : i32
    %49 = arith.cmpi eq, %arg0, %c2_i32 : i32
    %50 = arith.ori %48, %49 : i1
    %51 = arith.extui %50 : i1 to i32
    %c0_i32_28 = arith.constant 0 : i32
    %52 = arith.cmpi ne, %51, %c0_i32_28 : i32
    scf.if %52 {
      %cst_34 = arith.constant 5.000000e-01 : f32
      %58 = vector.broadcast %cst_34 : f32 to vector<16x256xf32>
      %59 = arith.mulf %58, %44 : vector<16x256xf32>
      %60 = math.tanh %59 : vector<16x256xf32>
      %cst_35 = arith.constant 1.000000e+00 : f32
      %61 = vector.broadcast %cst_35 : f32 to vector<16x256xf32>
      %62 = arith.addf %60, %61 : vector<16x256xf32>
      %cst_36 = arith.constant 5.000000e-01 : f32
      %63 = vector.broadcast %cst_36 : f32 to vector<16x256xf32>
      %64 = arith.mulf %63, %62 : vector<16x256xf32>
      %c0_37 = arith.constant 0 : index
      %c0_38 = arith.constant 0 : index
      %65 = vector.load %arg9[%c0_37, %c0_38] : memref<16x256xf32, #tpu.memory_space<vmem>>, vector<16x256xf32>
      tpu.vector_store %arg9[%c0_37, %c0_38], %64 {strides = array<i32>} : memref<16x256xf32, #tpu.memory_space<vmem>>, vector<16x256xf32>,
    } else {
    }
    %c3_i32 = arith.constant 3 : i32
    %53 = arith.cmpi eq, %arg0, %c3_i32 : i32
    %54 = arith.extui %53 : i1 to i32
    %c0_i32_29 = arith.constant 0 : i32
    %55 = arith.cmpi ne, %54, %c0_i32_29 : i32
    scf.if %55 {
      %c0_34 = arith.constant 0 : index
      %c0_35 = arith.constant 0 : index
      %58 = vector.load %arg9[%c0_34, %c0_35] : memref<16x256xf32, #tpu.memory_space<vmem>>, vector<16x256xf32>
      tpu.vector_store %arg9[%c0_34, %c0_35], %44 {strides = array<i32>} : memref<16x256xf32, #tpu.memory_space<vmem>>, vector<16x256xf32>,
    } else {
    }
    %c0_30 = arith.constant 0 : index
    %c0_31 = arith.constant 0 : index
    %56 = vector.load %arg9[%c0_30, %c0_31] : memref<16x256xf32, #tpu.memory_space<vmem>>, vector<16x256xf32>
    %c0_32 = arith.constant 0 : index
    %c0_33 = arith.constant 0 : index
    %57 = vector.load %arg8[%c0_32, %c0_33] : memref<16x256xf32, #tpu.memory_space<vmem>>, vector<16x256xf32>
    tpu.vector_store %arg8[%c0_32, %c0_33], %56 {strides = array<i32>} : memref<16x256xf32, #tpu.memory_space<vmem>>, vector<16x256xf32>,
    return
  }
  func.func @transform_0(%arg0: i32) -> (i32, i32) {
    %c0_i32 = arith.constant 0 : i32
    %c0_i32_0 = arith.constant 0 : i32
    %c0_i32_1 = arith.constant 0 : i32
    return %c0_i32, %c0_i32_0 : i32, i32
  }
  func.func @transform_1(%arg0: i32) -> (i32, i32) {
    %c0_i32 = arith.constant 0 : i32
    %c0_i32_0 = arith.constant 0 : i32
    %c0_i32_1 = arith.constant 0 : i32
    return %c0_i32, %c0_i32_0 : i32, i32
  }
  func.func @transform_2(%arg0: i32) -> (i32, i32) {
    %c0_i32 = arith.constant 0 : i32
    %c0_i32_0 = arith.constant 0 : i32
    %c0_i32_1 = arith.constant 0 : i32
    return %c0_i32, %c0_i32_0 : i32, i32
  }
  func.func @transform_3(%arg0: i32) -> (i32, i32) {
    %c0_i32 = arith.constant 0 : i32
    %c0_i32_0 = arith.constant 0 : i32
    %c0_i32_1 = arith.constant 0 : i32
    return %c0_i32, %c0_i32_0 : i32, i32
  }
  func.func @transform_4(%arg0: i32) -> (i32, i32, i32) {
    %c0_i32 = arith.constant 0 : i32
    %c0_i32_0 = arith.constant 0 : i32
    %c0_i32_1 = arith.constant 0 : i32
    return %arg0, %c0_i32, %c0_i32_0 : i32, i32, i32
  }
  func.func @transform_5(%arg0: i32) -> (i32, i32, i32) {
    %c0_i32 = arith.constant 0 : i32
    %c0_i32_0 = arith.constant 0 : i32
    %c0_i32_1 = arith.constant 0 : i32
    return %arg0, %c0_i32, %c0_i32_0 : i32, i32, i32
  }
  func.func @transform_6(%arg0: i32) -> (i32, i32, i32) {
    %c0_i32 = arith.constant 0 : i32
    %c0_i32_0 = arith.constant 0 : i32
    %c0_i32_1 = arith.constant 0 : i32
    return %arg0, %c0_i32, %c0_i32_0 : i32, i32, i32
  }
  func.func @transform_7(%arg0: i32) -> (i32, i32) {
    %c0_i32 = arith.constant 0 : i32
    %c0_i32_0 = arith.constant 0 : i32
    %c0_i32_1 = arith.constant 0 : i32
    return %c0_i32, %c0_i32_0 : i32, i32
  }
}

</mosaic_0001>

<llo_original>
// kernel: sub.12
$region0: #{sub.12}
  #allocation0 [shape = 's32[1]{0}', space=sflag, size = 0x4, scoped, tag = 'scoped memory for sub.12']
  %s0 = inlined_call_operand.vmem [shape: f32[58,20], index: 0, kind: input, shape index: {}]
  %s1 = inlined_call_operand.vmem [shape: f32[58,20], index: 1, kind: input, shape index: {}]
  %s2 = inlined_call_operand.vmem [shape: f32[58,20], index: 2, kind: output, shape index: {}]
  %v3 = vld [vmem:[%s0] sm:$0xff]
  %v4 = vld [vmem:[%s1] sm:$0xff]
  %5 = xla_tuple %v3, %v4
  %6 = xla_tuple %5
  %v7 = vsub.f32 %v3, %v4
  %8 = xla_tuple %v7
  %9 = vst [vmem:[%s2] sm:$0xff] %v7
  %s10 = scalar_lea.vmem %s0, 8
  %v11 = vld [vmem:[%s10] sm:$0xff]
  %s12 = scalar_lea.vmem %s1, 8
  %v13 = vld [vmem:[%s12] sm:$0xff]
  %14 = xla_tuple %v11, %v13
  %15 = xla_tuple %14
  %v16 = vsub.f32 %v11, %v13
  %17 = xla_tuple %v16
  %s18 = scalar_lea.vmem %s2, 8
  %19 = vst [vmem:[%s18] sm:$0xff] %v16
  %s20 = scalar_lea.vmem %s0, 16
  %v21 = vld [vmem:[%s20] sm:$0xff]
  %s22 = scalar_lea.vmem %s1, 16
  %v23 = vld [vmem:[%s22] sm:$0xff]
  %24 = xla_tuple %v21, %v23
  %25 = xla_tuple %24
  %v26 = vsub.f32 %v21, %v23
  %27 = xla_tuple %v26
  %s28 = scalar_lea.vmem %s2, 16
  %29 = vst [vmem:[%s28] sm:$0xff] %v26
  %s30 = scalar_lea.vmem %s0, 24
  %v31 = vld [vmem:[%s30] sm:$0xff]
  %s32 = scalar_lea.vmem %s1, 24
  %v33 = vld [vmem:[%s32] sm:$0xff]
  %34 = xla_tuple %v31, %v33
  %35 = xla_tuple %34
  %v36 = vsub.f32 %v31, %v33
  %37 = xla_tuple %v36
  %s38 = scalar_lea.vmem %s2, 24
  %39 = vst [vmem:[%s38] sm:$0xff] %v36
  %s40 = scalar_lea.vmem %s0, 32
  %v41 = vld [vmem:[%s40] sm:$0xff]
  %s42 = scalar_lea.vmem %s1, 32
  %v43 = vld [vmem:[%s42] sm:$0xff]
  %44 = xla_tuple %v41, %v43
  %45 = xla_tuple %44
  %v46 = vsub.f32 %v41, %v43
  %47 = xla_tuple %v46
  %s48 = scalar_lea.vmem %s2, 32
  %49 = vst [vmem:[%s48] sm:$0xff] %v46
  %s50 = scalar_lea.vmem %s0, 40
  %v51 = vld [vmem:[%s50] sm:$0xff]
  %s52 = scalar_lea.vmem %s1, 40
  %v53 = vld [vmem:[%s52] sm:$0xff]
  %54 = xla_tuple %v51, %v53
  %55 = xla_tuple %54
  %v56 = vsub.f32 %v51, %v53
  %57 = xla_tuple %v56
  %s58 = scalar_lea.vmem %s2, 40
  %59 = vst [vmem:[%s58] sm:$0xff] %v56
  %s60 = scalar_lea.vmem %s0, 48
  %v61 = vld [vmem:[%s60] sm:$0xff]
  %s62 = scalar_lea.vmem %s1, 48
  %v63 = vld [vmem:[%s62] sm:$0xff]
  %64 = xla_tuple %v61, %v63
  %65 = xla_tuple %64
  %v66 = vsub.f32 %v61, %v63
  %67 = xla_tuple %v66
  %s68 = scalar_lea.vmem %s2, 48
  %69 = vst [vmem:[%s68] sm:$0xff] %v66
  %s70 = scalar_lea.vmem %s0, 56
  %v71 = vld [vmem:[%s70] sm:$0xff]
  %s72 = scalar_lea.vmem %s1, 56
  %v73 = vld [vmem:[%s72] sm:$0xff]
  %74 = xla_tuple %v71, %v73
  %75 = xla_tuple %74
  %v76 = vsub.f32 %v71, %v73
  %77 = xla_tuple %v76
  %s78 = scalar_lea.vmem %s2, 56
  %79 = vst [vmem:[%s78] sm:$0xff] %v76

// kernel: abode_uncond_forward.1
$region0: #{abode_uncond_forward.1}
  #allocation0 [shape = 'u32[]', space=smem, size = 0x4, offset = 0x4, fixed_abs, tag = 'smem constant byte address 0x4 - core index']
  #allocation1 [shape = 'u32[72,128]{1,0:T(1,128)}', space=vmem, size = 0x9000, scoped, tag = 'internal scratch']
  #allocation2 [shape = 'f32[16,256]{1,0:T(8,128)}', space=vmem, size = 0x4000, scoped, tag = 'scratch operand']
  %s0 = inlined_call_operand.vmem [shape: f32[16,256], index: 0, kind: input, shape index: {}]
  %s1 = inlined_call_operand.vmem [shape: f32[64,16], index: 1, kind: input, shape index: {}]
  %s2 = inlined_call_operand.vmem [shape: f32[16,64], index: 2, kind: input, shape index: {}]
  %s3 = inlined_call_operand.vmem [shape: f32[64,48], index: 3, kind: input, shape index: {}]
  %s4 = inlined_call_operand.vmem [shape: f32[4,256,1024], index: 4, kind: input, shape index: {}]
  %s5 = inlined_call_operand.vmem [shape: f32[4,1,1024], index: 5, kind: input, shape index: {}]
  %s6 = inlined_call_operand.vmem [shape: f32[4,48,256], index: 6, kind: input, shape index: {}]
  %s7 = inlined_call_operand.vmem [shape: f32[16,256], index: 7, kind: output, shape index: {}]
  %s8 = sld [smem:[#allocation0]]
  $region77: #{abode_uncond_forward.1} parent=0
    _
  %s10 = ssub.s32 1, %s8
  %s11 = scalar_select 0, %s10, %s8
  loop: start=0, step=1, limit=6
  $region2: #{abode_uncond_forward.1} parent=0 // loop_pre_header
    _
  $region3: #{abode_uncond_forward.1} parent=0 // loop_header
    %s13 = sphi 0, %s17
    %p14 = scmp.ge.s32.totalorder %s13, 6
    %s21 = sphi 0, %s21
    %s23 = sphi 0, %s21
    %s24 = sphi 0, %s23
    %s38 = sphi 0, %s24
    %s42 = sphi 0, %s42
    %s44 = sphi 0, %s42
    %s45 = sphi 0, %s44
    %s59 = sphi 0, %s45
    %s63 = sphi 0, %s63
    %s65 = sphi 0, %s63
    %s66 = sphi 0, %s65
    %s80 = sphi 0, %s66
    %s84 = sphi 0, %s84
    %s86 = sphi 0, %s84
    %s87 = sphi 0, %s86
    %s101 = sphi 0, %s87
    %s107 = sphi 0, %s109
    %s110 = sphi 0, %s107
    %s111 = sphi 0, %s110
    %s127 = sphi 0, %s111
    %s133 = sphi 0, %s135
    %s136 = sphi 0, %s133
    %s137 = sphi 0, %s136
    %s153 = sphi 0, %s137
    %s159 = sphi 0, %s161
    %s162 = sphi 0, %s159
    %s163 = sphi 0, %s162
    %s179 = sphi 0, %s163
    %s183 = sphi 0, %s183
    %s185 = sphi 0, %s183
    %s186 = sphi 0, %s185
    %s200 = sphi 0, %s186
  $region4: #{abode_uncond_forward.1} parent=0 // loop_header_branch
    %16 = sbr.rel (%p14) target = $region8
  $region5: #{abode_uncond_forward.1} parent=0 // loop_body
    %s18 = ssub.s32 %s13, 1
    %s19 = ssub.s32 %s13, 2
    %s20 = sadd.s32 %s13, 1
    %s22 = sadd.s32 %s21, 1
    %p25 = scmp.eq.s32.totalorder %s13, 3
    %p26 = scmp.ne.s32.totalorder %s21, %s23
    %p27 = scmp.eq.s32.totalorder %s13, 0
    %p28 = por %p26, %p27
    %p29 = scmp.ne.s32.totalorder %s21, %s23
    %p30 = scmp.eq.s32.totalorder %s18, 3
    %p31 = por %p29, %p30
    %p32 = scmp.ne.s32.totalorder %s23, %s24
    %p33 = scmp.eq.s32.totalorder %s18, 0
    %p34 = por %p32, %p33
    %p35 = scmp.ne.s32.totalorder %s23, %s24
    %p36 = scmp.eq.s32.totalorder %s19, 3
    %p37 = por %p35, %p36
    %p39 = scmp.ne.s32.totalorder %s24, %s38
    %p40 = scmp.eq.s32.totalorder %s19, 0
    %p41 = por %p39, %p40
    %s43 = sadd.s32 %s42, 1
    %p46 = scmp.eq.s32.totalorder %s13, 3
    %p47 = scmp.ne.s32.totalorder %s42, %s44
    %p48 = scmp.eq.s32.totalorder %s13, 0
    %p49 = por %p47, %p48
    %p50 = scmp.ne.s32.totalorder %s42, %s44
    %p51 = scmp.eq.s32.totalorder %s18, 3
    %p52 = por %p50, %p51
    %p53 = scmp.ne.s32.totalorder %s44, %s45
    %p54 = scmp.eq.s32.totalorder %s18, 0
    %p55 = por %p53, %p54
    %p56 = scmp.ne.s32.totalorder %s44, %s45
    %p57 = scmp.eq.s32.totalorder %s19, 3
    %p58 = por %p56, %p57
    %p60 = scmp.ne.s32.totalorder %s45, %s59
    %p61 = scmp.eq.s32.totalorder %s19, 0
    %p62 = por %p60, %p61
    %s64 = sadd.s32 %s63, 1
    %p67 = scmp.eq.s32.totalorder %s13, 3
    %p68 = scmp.ne.s32.totalorder %s63, %s65
    %p69 = scmp.eq.s32.totalorder %s13, 0
    %p70 = por %p68, %p69
    %p71 = scmp.ne.s32.totalorder %s63, %s65
    %p72 = scmp.eq.s32.totalorder %s18, 3
    %p73 = por %p71, %p72
    %p74 = scmp.ne.s32.totalorder %s65, %s66
    %p75 = scmp.eq.s32.totalorder %s18, 0
    %p76 = por %p74, %p75
    %p77 = scmp.ne.s32.totalorder %s65, %s66
    %p78 = scmp.eq.s32.totalorder %s19, 3
    %p79 = por %p77, %p78
    %p81 = scmp.ne.s32.totalorder %s66, %s80
    %p82 = scmp.eq.s32.totalorder %s19, 0
    %p83 = por %p81, %p82
    %s85 = sadd.s32 %s84, 1
    %p88 = scmp.eq.s32.totalorder %s13, 3
    %p89 = scmp.ne.s32.totalorder %s84, %s86
    %p90 = scmp.eq.s32.totalorder %s13, 0
    %p91 = por %p89, %p90
    %p92 = scmp.ne.s32.totalorder %s84, %s86
    %p93 = scmp.eq.s32.totalorder %s18, 3
    %p94 = por %p92, %p93
    %p95 = scmp.ne.s32.totalorder %s86, %s87
    %p96 = scmp.eq.s32.totalorder %s18, 0
    %p97 = por %p95, %p96
    %p98 = scmp.ne.s32.totalorder %s86, %s87
    %p99 = scmp.eq.s32.totalorder %s19, 3
    %p100 = por %p98, %p99
    %p102 = scmp.ne.s32.totalorder %s87, %s101
    %p103 = scmp.eq.s32.totalorder %s19, 0
    %p104 = por %p102, %p103
    %s105 = ssub.s32 %s13, %s20
    %p106 = scmp.eq.s32.totalorder %s105, 0
    %s108 = sadd.s32 %s107, 1
    %s109 = scalar_select %p106, %s107, %s108
    %p112 = pneg %p106
    %p113 = scmp.eq.s32.totalorder %s13, 3
    %p114 = por %p112, %p113
    %p115 = scmp.ne.s32.totalorder %s107, %s110
    %p116 = scmp.eq.s32.totalorder %s13, 0
    %p117 = por %p115, %p116
    %p118 = scmp.ne.s32.totalorder %s107, %s110
    %p119 = scmp.eq.s32.totalorder %s18, 3
    %p120 = por %p118, %p119
    %p121 = scmp.ne.s32.totalorder %s110, %s111
    %p122 = scmp.eq.s32.totalorder %s18, 0
    %p123 = por %p121, %p122
    %p124 = scmp.ne.s32.totalorder %s110, %s111
    %p125 = scmp.eq.s32.totalorder %s19, 3
    %p126 = por %p124, %p125
    %p128 = scmp.ne.s32.totalorder %s111, %s127
    %p129 = scmp.eq.s32.totalorder %s19, 0
    %p130 = por %p128, %p129
    %s131 = ssub.s32 %s13, %s20
    %p132 = scmp.eq.s32.totalorder %s131, 0
    %s134 = sadd.s32 %s133, 1
    %s135 = scalar_select %p132, %s133, %s134
    %p138 = pneg %p132
    %p139 = scmp.eq.s32.totalorder %s13, 3
    %p140 = por %p138, %p139
    %p141 = scmp.ne.s32.totalorder %s133, %s136
    %p142 = scmp.eq.s32.totalorder %s13, 0
    %p143 = por %p141, %p142
    %p144 = scmp.ne.s32.totalorder %s133, %s136
    %p145 = scmp.eq.s32.totalorder %s18, 3
    %p146 = por %p144, %p145
    %p147 = scmp.ne.s32.totalorder %s136, %s137
    %p148 = scmp.eq.s32.totalorder %s18, 0
    %p149 = por %p147, %p148
    %p150 = scmp.ne.s32.totalorder %s136, %s137
    %p151 = scmp.eq.s32.totalorder %s19, 3
    %p152 = por %p150, %p151
    %p154 = scmp.ne.s32.totalorder %s137, %s153
    %p155 = scmp.eq.s32.totalorder %s19, 0
    %p156 = por %p154, %p155
    %s157 = ssub.s32 %s13, %s20
    %p158 = scmp.eq.s32.totalorder %s157, 0
    %s160 = sadd.s32 %s159, 1
    %s161 = scalar_select %p158, %s159, %s160
    %p164 = pneg %p158
    %p165 = scmp.eq.s32.totalorder %s13, 3
    %p166 = por %p164, %p165
    %p167 = scmp.ne.s32.totalorder %s159, %s162
    %p168 = scmp.eq.s32.totalorder %s13, 0
    %p169 = por %p167, %p168
    %p170 = scmp.ne.s32.totalorder %s159, %s162
    %p171 = scmp.eq.s32.totalorder %s18, 3
    %p172 = por %p170, %p171
    %p173 = scmp.ne.s32.totalorder %s162, %s163
    %p174 = scmp.eq.s32.totalorder %s18, 0
    %p175 = por %p173, %p174
    %p176 = scmp.ne.s32.totalorder %s162, %s163
    %p177 = scmp.eq.s32.totalorder %s19, 3
    %p178 = por %p176, %p177
    %p180 = scmp.ne.s32.totalorder %s163, %s179
    %p181 = scmp.eq.s32.totalorder %s19, 0
    %p182 = por %p180, %p181
    %s184 = sadd.s32 %s183, 1
    %p187 = scmp.eq.s32.totalorder %s13, 3
    %p188 = scmp.ne.s32.totalorder %s183, %s185
    %p189 = scmp.eq.s32.totalorder %s13, 0
    %p190 = por %p188, %p189
    %p191 = scmp.ne.s32.totalorder %s183, %s185
    %p192 = scmp.eq.s32.totalorder %s18, 3
    %p193 = por %p191, %p192
    %p194 = scmp.ne.s32.totalorder %s185, %s186
    %p195 = scmp.eq.s32.totalorder %s18, 0
    %p196 = por %p194, %p195
    %p197 = scmp.ne.s32.totalorder %s185, %s186
    %p198 = scmp.eq.s32.totalorder %s19, 3
    %p199 = por %p197, %p198
    %p201 = scmp.ne.s32.totalorder %s186, %s200
    %p202 = scmp.eq.s32.totalorder %s19, 0
    %p203 = por %p201, %p202
    %p204 = scmp.le.s32.totalorder 1, %s13
    %p205 = scmp.lt.s32.totalorder %s13, 5
    %p206 = pnand %p204, %p205
    %p207 = pneg %p206
    // Predicated region
    $region9: #{abode_uncond_forward.1} parent=5 // pred_check
      _
    $region10: #{abode_uncond_forward.1} parent=5 // pred_check_branch
      %209 = sbr.rel (%p206) target = $region12
    $region11: #{abode_uncond_forward.1} parent=5 // pred_region
      %s210 = ssub.s32 %s13, 1
      // Predicated region
      $region13: #{abode_uncond_forward.1} parent=11 // pred_check
        %p211 = pneg %p34
      $region14: #{abode_uncond_forward.1} parent=11 // pred_check_branch
        %213 = sbr.rel (%p211) target = $region16
      $region15: #{abode_uncond_forward.1} parent=11 // pred_region
        _
      $region16: #{abode_uncond_forward.1} parent=11 // pred_fallthru
        _
      // Predicated region
      $region17: #{abode_uncond_forward.1} parent=11 // pred_check
        %p214 = pneg %p55
      $region18: #{abode_uncond_forward.1} parent=11 // pred_check_branch
        %216 = sbr.rel (%p214) target = $region20
      $region19: #{abode_uncond_forward.1} parent=11 // pred_region
        _
      $region20: #{abode_uncond_forward.1} parent=11 // pred_fallthru
        _
      // Predicated region
      $region21: #{abode_uncond_forward.1} parent=11 // pred_check
        %p217 = pneg %p76
      $region22: #{abode_uncond_forward.1} parent=11 // pred_check_branch
        %219 = sbr.rel (%p217) target = $region24
      $region23: #{abode_uncond_forward.1} parent=11 // pred_region
        _
      $region24: #{abode_uncond_forward.1} parent=11 // pred_fallthru
        _
      // Predicated region
      $region25: #{abode_uncond_forward.1} parent=11 // pred_check
        %p220 = pneg %p97
      $region26: #{abode_uncond_forward.1} parent=11 // pred_check_branch
        %222 = sbr.rel (%p220) target = $region28
      $region27: #{abode_uncond_forward.1} parent=11 // pred_region
        _
      $region28: #{abode_uncond_forward.1} parent=11 // pred_fallthru
        _
    $region12: #{abode_uncond_forward.1} parent=5 // pred_fallthru
      _
    %p223 = scmp.lt.s32.totalorder %s13, 4
    // Predicated region
    $region29: #{abode_uncond_forward.1} parent=5 // pred_check
      %p224 = pneg %p223
    $region30: #{abode_uncond_forward.1} parent=5 // pred_check_branch
      %226 = sbr.rel (%p224) target = $region32
    $region31: #{abode_uncond_forward.1} parent=5 // pred_region
      // Predicated region
      $region33: #{abode_uncond_forward.1} parent=31 // pred_check
        %p227 = pneg %p117
      $region34: #{abode_uncond_forward.1} parent=31 // pred_check_branch
        %229 = sbr.rel (%p227) target = $region36
      $region35: #{abode_uncond_forward.1} parent=31 // pred_region
        %p230 = scmp.lt.s32.totalorder %s13, 3
        %s231 = scalar_select %p230, %s13, 3
        %s232 = smul.addr %s231, 256
        %s233 = smul.addr %s232, 8
        %s234 = scalar_lea.vmem %s4, %s233
      $region36: #{abode_uncond_forward.1} parent=31 // pred_fallthru
        _
      // Predicated region
      $region37: #{abode_uncond_forward.1} parent=31 // pred_check
        %p235 = pneg %p143
      $region38: #{abode_uncond_forward.1} parent=31 // pred_check_branch
        %237 = sbr.rel (%p235) target = $region40
      $region39: #{abode_uncond_forward.1} parent=31 // pred_region
        %p238 = scmp.lt.s32.totalorder %s13, 3
        %s239 = scalar_select %p238, %s13, 3
        %s240 = smul.addr %s239, 8
        %s241 = scalar_lea.vmem %s5, %s240
      $region40: #{abode_uncond_forward.1} parent=31 // pred_fallthru
        _
      // Predicated region
      $region41: #{abode_uncond_forward.1} parent=31 // pred_check
        %p242 = pneg %p169
      $region42: #{abode_uncond_forward.1} parent=31 // pred_check_branch
        %244 = sbr.rel (%p242) target = $region44
      $region43: #{abode_uncond_forward.1} parent=31 // pred_region
        %p245 = scmp.lt.s32.totalorder %s13, 3
        %s246 = scalar_select %p245, %s13, 3
        %s247 = smul.addr %s246, 12
        %s248 = smul.addr %s247, 8
        %s249 = scalar_lea.vmem %s6, %s248
      $region44: #{abode_uncond_forward.1} parent=31 // pred_fallthru
        _
    $region32: #{abode_uncond_forward.1} parent=5 // pred_fallthru
      _
    %p250 = scmp.le.s32.totalorder 1, %s13
    %p251 = scmp.lt.s32.totalorder %s13, 5
    %p252 = pnand %p250, %p251
    %p253 = pneg %p252
    // Predicated region
    $region45: #{abode_uncond_forward.1} parent=5 // pred_check
      _
    $region46: #{abode_uncond_forward.1} parent=5 // pred_check_branch
      %255 = sbr.rel (%p252) target = $region48
    $region47: #{abode_uncond_forward.1} parent=5 // pred_region
      %s256 = ssub.s32 %s13, 1
      %p257 = pneg %p34
      %p258 = pneg %p31
      %p259 = pneg %p55
      %p260 = pneg %p52
      %p261 = pneg %p76
      %p262 = pneg %p73
      %p263 = pneg %p97
      %p264 = pneg %p94
      %p265 = scmp.lt.s32.totalorder %s18, 3
      %s266 = scalar_select %p265, %s18, 3
      %s267 = smul.addr %s266, 256
      %s268 = smul.addr %s267, 8
      %s269 = scalar_lea.vmem %s4, %s268
      %p270 = pneg %p123
      %p271 = pneg %p120
      %p272 = scmp.lt.s32.totalorder %s18, 3
      %s273 = scalar_select %p272, %s18, 3
      %s274 = smul.addr %s273, 8
      %s275 = scalar_lea.vmem %s5, %s274
      %p276 = pneg %p149
      %p277 = pneg %p146
      %p278 = scmp.lt.s32.totalorder %s18, 3
      %s279 = scalar_select %p278, %s18, 3
      %s280 = smul.addr %s279, 12
      %s281 = smul.addr %s280, 8
      %s282 = scalar_lea.vmem %s6, %s281
      %p283 = pneg %p175
      %p284 = pneg %p172
      %p285 = pneg %p196
      %p286 = pneg %p193
      %p287 = scmp.lt.s32.totalorder %s18, 3
      %s288 = scalar_select %p287, %s18, 3
      %s289 = smul.addr %s288, 256
      %s290 = smul.addr %s289, 8
      %s291 = scalar_lea.vmem %s4, %s290
      %p292 = scmp.lt.s32.totalorder %s18, 3
      %s293 = scalar_select %p292, %s18, 3
      %s294 = smul.addr %s293, 8
      %s295 = scalar_lea.vmem %s5, %s294
      %p296 = scmp.lt.s32.totalorder %s18, 3
      %s297 = scalar_select %p296, %s18, 3
      %s298 = smul.addr %s297, 12
      %s299 = smul.addr %s298, 8
      %s300 = scalar_lea.vmem %s6, %s299
      %p301 = scmp.eq.s32.totalorder %s18, 0
      // Predicated region
      $region49: #{abode_uncond_forward.1} parent=47 // pred_check
        %p302 = pneg %p301
      $region50: #{abode_uncond_forward.1} parent=47 // pred_check_branch
        %304 = sbr.rel (%p302) target = $region52
      $region51: #{abode_uncond_forward.1} parent=47 // pred_region
        %v305 = vld [vmem:[%s0] sm:$0xff]
        %v306 = vld [vmem:[%s0 + $0x8] sm:$0xff]
        %v307 = vld [vmem:[%s0 + $0x10] sm:$0xff]
        %v308 = vld [vmem:[%s0 + $0x18] sm:$0xff]
        %309 = vst [vmem:[#allocation2] sm:$0xff] %v305
        %310 = vst [vmem:[#allocation2 + $0x8] sm:$0xff] %v306
        %311 = vst [vmem:[#allocation2 + $0x10] sm:$0xff] %v307
        %312 = vst [vmem:[#allocation2 + $0x18] sm:$0xff] %v308
      $region52: #{abode_uncond_forward.1} parent=47 // pred_fallthru
        _
      %v313 = vld [vmem:[#allocation2] sm:$0xff]
      %v314 = vld [vmem:[#allocation2 + $0x8] sm:$0xff]
      %v315 = vld [vmem:[#allocation2 + $0x10] sm:$0xff]
      %v316 = vld [vmem:[#allocation2 + $0x18] sm:$0xff]
      %v317 = vld [vmem:[%s291] sm:$0xff]
      %v318 = vld [vmem:[%s291 + $0x8] sm:$0xff]
      %v319 = vld [vmem:[%s291 + $0x10] sm:$0xff]
      %v320 = vld [vmem:[%s291 + $0x18] sm:$0xff]
      %v321 = vld [vmem:[%s291 + $0x20] sm:$0xff]
      %v322 = vld [vmem:[%s291 + $0x28] sm:$0xff]
      %v323 = vld [vmem:[%s291 + $0x30] sm:$0xff]
      %v324 = vld [vmem:[%s291 + $0x38] sm:$0xff]
      %v325 = vld [vmem:[%s291 + $0x40] sm:$0xff]
      %v326 = vld [vmem:[%s291 + $0x48] sm:$0xff]
      %v327 = vld [vmem:[%s291 + $0x50] sm:$0xff]
      %v328 = vld [vmem:[%s291 + $0x58] sm:$0xff]
      %v329 = vld [vmem:[%s291 + $0x60] sm:$0xff]
      %v330 = vld [vmem:[%s291 + $0x68] sm:$0xff]
      %v331 = vld [vmem:[%s291 + $0x70] sm:$0xff]
      %v332 = vld [vmem:[%s291 + $0x78] sm:$0xff]
      %v333 = vld [vmem:[%s291 + $0x80] sm:$0xff]
      %v334 = vld [vmem:[%s291 + $0x88] sm:$0xff]
      %v335 = vld [vmem:[%s291 + $0x90] sm:$0xff]
      %v336 = vld [vmem:[%s291 + $0x98] sm:$0xff]
      %v337 = vld [vmem:[%s291 + $0xa0] sm:$0xff]
      %v338 = vld [vmem:[%s291 + $0xa8] sm:$0xff]
      %v339 = vld [vmem:[%s291 + $0xb0] sm:$0xff]
      %v340 = vld [vmem:[%s291 + $0xb8] sm:$0xff]
      %v341 = vld [vmem:[%s291 + $0xc0] sm:$0xff]
      %v342 = vld [vmem:[%s291 + $0xc8] sm:$0xff]
      %v343 = vld [vmem:[%s291 + $0xd0] sm:$0xff]
      %v344 = vld [vmem:[%s291 + $0xd8] sm:$0xff]
      %v345 = vld [vmem:[%s291 + $0xe0] sm:$0xff]
      %v346 = vld [vmem:[%s291 + $0xe8] sm:$0xff]
      %v347 = vld [vmem:[%s291 + $0xf0] sm:$0xff]
      %v348 = vld [vmem:[%s291 + $0xf8] sm:$0xff]
      %v349 = vld [vmem:[%s291 + $0x100] sm:$0xff]
      %v350 = vld [vmem:[%s291 + $0x108] sm:$0xff]
      %v351 = vld [vmem:[%s291 + $0x110] sm:$0xff]
      %v352 = vld [vmem:[%s291 + $0x118] sm:$0xff]
      %v353 = vld [vmem:[%s291 + $0x120] sm:$0xff]
      %v354 = vld [vmem:[%s291 + $0x128] sm:$0xff]
      %v355 = vld [vmem:[%s291 + $0x130] sm:$0xff]
      %v356 = vld [vmem:[%s291 + $0x138] sm:$0xff]
      %v357 = vld [vmem:[%s291 + $0x140] sm:$0xff]
      %v358 = vld [vmem:[%s291 + $0x148] sm:$0xff]
      %v359 = vld [vmem:[%s291 + $0x150] sm:$0xff]
      %v360 = vld [vmem:[%s291 + $0x158] sm:$0xff]
      %v361 = vld [vmem:[%s291 + $0x160] sm:$0xff]
      %v362 = vld [vmem:[%s291 + $0x168] sm:$0xff]
      %v363 = vld [vmem:[%s291 + $0x170] sm:$0xff]
      %v364 = vld [vmem:[%s291 + $0x178] sm:$0xff]
      %v365 = vld [vmem:[%s291 + $0x180] sm:$0xff]
      %v366 = vld [vmem:[%s291 + $0x188] sm:$0xff]
      %v367 = vld [vmem:[%s291 + $0x190] sm:$0xff]
      %v368 = vld [vmem:[%s291 + $0x198] sm:$0xff]
      %v369 = vld [vmem:[%s291 + $0x1a0] sm:$0xff]
      %v370 = vld [vmem:[%s291 + $0x1a8] sm:$0xff]
      %v371 = vld [vmem:[%s291 + $0x1b0] sm:$0xff]
      %v372 = vld [vmem:[%s291 + $0x1b8] sm:$0xff]
      %v373 = vld [vmem:[%s291 + $0x1c0] sm:$0xff]
      %v374 = vld [vmem:[%s291 + $0x1c8] sm:$0xff]
      %v375 = vld [vmem:[%s291 + $0x1d0] sm:$0xff]
      %v376 = vld [vmem:[%s291 + $0x1d8] sm:$0xff]
      %v377 = vld [vmem:[%s291 + $0x1e0] sm:$0xff]
      %v378 = vld [vmem:[%s291 + $0x1e8] sm:$0xff]
      %v379 = vld [vmem:[%s291 + $0x1f0] sm:$0xff]
      %v380 = vld [vmem:[%s291 + $0x1f8] sm:$0xff]
      %v381 = vld [vmem:[%s291 + $0x200] sm:$0xff]
      %v382 = vld [vmem:[%s291 + $0x208] sm:$0xff]
      %v383 = vld [vmem:[%s291 + $0x210] sm:$0xff]
      %v384 = vld [vmem:[%s291 + $0x218] sm:$0xff]
      %v385 = vld [vmem:[%s291 + $0x220] sm:$0xff]
      %v386 = vld [vmem:[%s291 + $0x228] sm:$0xff]
      %v387 = vld [vmem:[%s291 + $0x230] sm:$0xff]
      %v388 = vld [vmem:[%s291 + $0x238] sm:$0xff]
      %v389 = vld [vmem:[%s291 + $0x240] sm:$0xff]
      %v390 = vld [vmem:[%s291 + $0x248] sm:$0xff]
      %v391 = vld [vmem:[%s291 + $0x250] sm:$0xff]
      %v392 = vld [vmem:[%s291 + $0x258] sm:$0xff]
      %v393 = vld [vmem:[%s291 + $0x260] sm:$0xff]
      %v394 = vld [vmem:[%s291 + $0x268] sm:$0xff]
      %v395 = vld [vmem:[%s291 + $0x270] sm:$0xff]
      %v396 = vld [vmem:[%s291 + $0x278] sm:$0xff]
      %v397 = vld [vmem:[%s291 + $0x280] sm:$0xff]
      %v398 = vld [vmem:[%s291 + $0x288] sm:$0xff]
      %v399 = vld [vmem:[%s291 + $0x290] sm:$0xff]
      %v400 = vld [vmem:[%s291 + $0x298] sm:$0xff]
      %v401 = vld [vmem:[%s291 + $0x2a0] sm:$0xff]
      %v402 = vld [vmem:[%s291 + $0x2a8] sm:$0xff]
      %v403 = vld [vmem:[%s291 + $0x2b0] sm:$0xff]
      %v404 = vld [vmem:[%s291 + $0x2b8] sm:$0xff]
      %v405 = vld [vmem:[%s291 + $0x2c0] sm:$0xff]
      %v406 = vld [vmem:[%s291 + $0x2c8] sm:$0xff]
      %v407 = vld [vmem:[%s291 + $0x2d0] sm:$0xff]
      %v408 = vld [vmem:[%s291 + $0x2d8] sm:$0xff]
      %v409 = vld [vmem:[%s291 + $0x2e0] sm:$0xff]
      %v410 = vld [vmem:[%s291 + $0x2e8] sm:$0xff]
      %v411 = vld [vmem:[%s291 + $0x2f0] sm:$0xff]
      %v412 = vld [vmem:[%s291 + $0x2f8] sm:$0xff]
      %v413 = vld [vmem:[%s291 + $0x300] sm:$0xff]
      %v414 = vld [vmem:[%s291 + $0x308] sm:$0xff]
      %v415 = vld [vmem:[%s291 + $0x310] sm:$0xff]
      %v416 = vld [vmem:[%s291 + $0x318] sm:$0xff]
      %v417 = vld [vmem:[%s291 + $0x320] sm:$0xff]
      %v418 = vld [vmem:[%s291 + $0x328] sm:$0xff]
      %v419 = vld [vmem:[%s291 + $0x330] sm:$0xff]
      %v420 = vld [vmem:[%s291 + $0x338] sm:$0xff]
      %v421 = vld [vmem:[%s291 + $0x340] sm:$0xff]
      %v422 = vld [vmem:[%s291 + $0x348] sm:$0xff]
      %v423 = vld [vmem:[%s291 + $0x350] sm:$0xff]
      %v424 = vld [vmem:[%s291 + $0x358] sm:$0xff]
      %v425 = vld [vmem:[%s291 + $0x360] sm:$0xff]
      %v426 = vld [vmem:[%s291 + $0x368] sm:$0xff]
      %v427 = vld [vmem:[%s291 + $0x370] sm:$0xff]
      %v428 = vld [vmem:[%s291 + $0x378] sm:$0xff]
      %v429 = vld [vmem:[%s291 + $0x380] sm:$0xff]
      %v430 = vld [vmem:[%s291 + $0x388] sm:$0xff]
      %v431 = vld [vmem:[%s291 + $0x390] sm:$0xff]
      %v432 = vld [vmem:[%s291 + $0x398] sm:$0xff]
      %v433 = vld [vmem:[%s291 + $0x3a0] sm:$0xff]
      %v434 = vld [vmem:[%s291 + $0x3a8] sm:$0xff]
      %v435 = vld [vmem:[%s291 + $0x3b0] sm:$0xff]
      %v436 = vld [vmem:[%s291 + $0x3b8] sm:$0xff]
      %v437 = vld [vmem:[%s291 + $0x3c0] sm:$0xff]
      %v438 = vld [vmem:[%s291 + $0x3c8] sm:$0xff]
      %v439 = vld [vmem:[%s291 + $0x3d0] sm:$0xff]
      %v440 = vld [vmem:[%s291 + $0x3d8] sm:$0xff]
      %v441 = vld [vmem:[%s291 + $0x3e0] sm:$0xff]
      %v442 = vld [vmem:[%s291 + $0x3e8] sm:$0xff]
      %v443 = vld [vmem:[%s291 + $0x3f0] sm:$0xff]
      %v444 = vld [vmem:[%s291 + $0x3f8] sm:$0xff]
      %v445 = vld [vmem:[%s291 + $0x400] sm:$0xff]
      %v446 = vld [vmem:[%s291 + $0x408] sm:$0xff]
      %v447 = vld [vmem:[%s291 + $0x410] sm:$0xff]
      %v448 = vld [vmem:[%s291 + $0x418] sm:$0xff]
      %v449 = vld [vmem:[%s291 + $0x420] sm:$0xff]
      %v450 = vld [vmem:[%s291 + $0x428] sm:$0xff]
      %v451 = vld [vmem:[%s291 + $0x430] sm:$0xff]
      %v452 = vld [vmem:[%s291 + $0x438] sm:$0xff]
      %v453 = vld [vmem:[%s291 + $0x440] sm:$0xff]
      %v454 = vld [vmem:[%s291 + $0x448] sm:$0xff]
      %v455 = vld [vmem:[%s291 + $0x450] sm:$0xff]
      %v456 = vld [vmem:[%s291 + $0x458] sm:$0xff]
      %v457 = vld [vmem:[%s291 + $0x460] sm:$0xff]
      %v458 = vld [vmem:[%s291 + $0x468] sm:$0xff]
      %v459 = vld [vmem:[%s291 + $0x470] sm:$0xff]
      %v460 = vld [vmem:[%s291 + $0x478] sm:$0xff]
      %v461 = vld [vmem:[%s291 + $0x480] sm:$0xff]
      %v462 = vld [vmem:[%s291 + $0x488] sm:$0xff]
      %v463 = vld [vmem:[%s291 + $0x490] sm:$0xff]
      %v464 = vld [vmem:[%s291 + $0x498] sm:$0xff]
      %v465 = vld [vmem:[%s291 + $0x4a0] sm:$0xff]
      %v466 = vld [vmem:[%s291 + $0x4a8] sm:$0xff]
      %v467 = vld [vmem:[%s291 + $0x4b0] sm:$0xff]
      %v468 = vld [vmem:[%s291 + $0x4b8] sm:$0xff]
      %v469 = vld [vmem:[%s291 + $0x4c0] sm:$0xff]
      %v470 = vld [vmem:[%s291 + $0x4c8] sm:$0xff]
      %v471 = vld [vmem:[%s291 + $0x4d0] sm:$0xff]
      %v472 = vld [vmem:[%s291 + $0x4d8] sm:$0xff]
      %v473 = vld [vmem:[%s291 + $0x4e0] sm:$0xff]
      %v474 = vld [vmem:[%s291 + $0x4e8] sm:$0xff]
      %v475 = vld [vmem:[%s291 + $0x4f0] sm:$0xff]
      %v476 = vld [vmem:[%s291 + $0x4f8] sm:$0xff]
      %v477 = vld [vmem:[%s291 + $0x500] sm:$0xff]
      %v478 = vld [vmem:[%s291 + $0x508] sm:$0xff]
      %v479 = vld [vmem:[%s291 + $0x510] sm:$0xff]
      %v480 = vld [vmem:[%s291 + $0x518] sm:$0xff]
      %v481 = vld [vmem:[%s291 + $0x520] sm:$0xff]
      %v482 = vld [vmem:[%s291 + $0x528] sm:$0xff]
      %v483 = vld [vmem:[%s291 + $0x530] sm:$0xff]
      %v484 = vld [vmem:[%s291 + $0x538] sm:$0xff]
      %v485 = vld [vmem:[%s291 + $0x540] sm:$0xff]
      %v486 = vld [vmem:[%s291 + $0x548] sm:$0xff]
      %v487 = vld [vmem:[%s291 + $0x550] sm:$0xff]
      %v488 = vld [vmem:[%s291 + $0x558] sm:$0xff]
      %v489 = vld [vmem:[%s291 + $0x560] sm:$0xff]
      %v490 = vld [vmem:[%s291 + $0x568] sm:$0xff]
      %v491 = vld [vmem:[%s291 + $0x570] sm:$0xff]
      %v492 = vld [vmem:[%s291 + $0x578] sm:$0xff]
      %v493 = vld [vmem:[%s291 + $0x580] sm:$0xff]
      %v494 = vld [vmem:[%s291 + $0x588] sm:$0xff]
      %v495 = vld [vmem:[%s291 + $0x590] sm:$0xff]
      %v496 = vld [vmem:[%s291 + $0x598] sm:$0xff]
      %v497 = vld [vmem:[%s291 + $0x5a0] sm:$0xff]
      %v498 = vld [vmem:[%s291 + $0x5a8] sm:$0xff]
      %v499 = vld [vmem:[%s291 + $0x5b0] sm:$0xff]
      %v500 = vld [vmem:[%s291 + $0x5b8] sm:$0xff]
      %v501 = vld [vmem:[%s291 + $0x5c0] sm:$0xff]
      %v502 = vld [vmem:[%s291 + $0x5c8] sm:$0xff]
      %v503 = vld [vmem:[%s291 + $0x5d0] sm:$0xff]
      %v504 = vld [vmem:[%s291 + $0x5d8] sm:$0xff]
      %v505 = vld [vmem:[%s291 + $0x5e0] sm:$0xff]
      %v506 = vld [vmem:[%s291 + $0x5e8] sm:$0xff]
      %v507 = vld [vmem:[%s291 + $0x5f0] sm:$0xff]
      %v508 = vld [vmem:[%s291 + $0x5f8] sm:$0xff]
      %v509 = vld [vmem:[%s291 + $0x600] sm:$0xff]
      %v510 = vld [vmem:[%s291 + $0x608] sm:$0xff]
      %v511 = vld [vmem:[%s291 + $0x610] sm:$0xff]
      %v512 = vld [vmem:[%s291 + $0x618] sm:$0xff]
      %v513 = vld [vmem:[%s291 + $0x620] sm:$0xff]
      %v514 = vld [vmem:[%s291 + $0x628] sm:$0xff]
      %v515 = vld [vmem:[%s291 + $0x630] sm:$0xff]
      %v516 = vld [vmem:[%s291 + $0x638] sm:$0xff]
      %v517 = vld [vmem:[%s291 + $0x640] sm:$0xff]
      %v518 = vld [vmem:[%s291 + $0x648] sm:$0xff]
      %v519 = vld [vmem:[%s291 + $0x650] sm:$0xff]
      %v520 = vld [vmem:[%s291 + $0x658] sm:$0xff]
      %v521 = vld [vmem:[%s291 + $0x660] sm:$0xff]
      %v522 = vld [vmem:[%s291 + $0x668] sm:$0xff]
      %v523 = vld [vmem:[%s291 + $0x670] sm:$0xff]
      %v524 = vld [vmem:[%s291 + $0x678] sm:$0xff]
      %v525 = vld [vmem:[%s291 + $0x680] sm:$0xff]
      %v526 = vld [vmem:[%s291 + $0x688] sm:$0xff]
      %v527 = vld [vmem:[%s291 + $0x690] sm:$0xff]
      %v528 = vld [vmem:[%s291 + $0x698] sm:$0xff]
      %v529 = vld [vmem:[%s291 + $0x6a0] sm:$0xff]
      %v530 = vld [vmem:[%s291 + $0x6a8] sm:$0xff]
      %v531 = vld [vmem:[%s291 + $0x6b0] sm:$0xff]
      %v532 = vld [vmem:[%s291 + $0x6b8] sm:$0xff]
      %v533 = vld [vmem:[%s291 + $0x6c0] sm:$0xff]
      %v534 = vld [vmem:[%s291 + $0x6c8] sm:$0xff]
      %v535 = vld [vmem:[%s291 + $0x6d0] sm:$0xff]
      %v536 = vld [vmem:[%s291 + $0x6d8] sm:$0xff]
      %v537 = vld [vmem:[%s291 + $0x6e0] sm:$0xff]
      %v538 = vld [vmem:[%s291 + $0x6e8] sm:$0xff]
      %v539 = vld [vmem:[%s291 + $0x6f0] sm:$0xff]
      %v540 = vld [vmem:[%s291 + $0x6f8] sm:$0xff]
      %v541 = vld [vmem:[%s291 + $0x700] sm:$0xff]
      %v542 = vld [vmem:[%s291 + $0x708] sm:$0xff]
      %v543 = vld [vmem:[%s291 + $0x710] sm:$0xff]
      %v544 = vld [vmem:[%s291 + $0x718] sm:$0xff]
      %v545 = vld [vmem:[%s291 + $0x720] sm:$0xff]
      %v546 = vld [vmem:[%s291 + $0x728] sm:$0xff]
      %v547 = vld [vmem:[%s291 + $0x730] sm:$0xff]
      %v548 = vld [vmem:[%s291 + $0x738] sm:$0xff]
      %v549 = vld [vmem:[%s291 + $0x740] sm:$0xff]
      %v550 = vld [vmem:[%s291 + $0x748] sm:$0xff]
      %v551 = vld [vmem:[%s291 + $0x750] sm:$0xff]
      %v552 = vld [vmem:[%s291 + $0x758] sm:$0xff]
      %v553 = vld [vmem:[%s291 + $0x760] sm:$0xff]
      %v554 = vld [vmem:[%s291 + $0x768] sm:$0xff]
      %v555 = vld [vmem:[%s291 + $0x770] sm:$0xff]
      %v556 = vld [vmem:[%s291 + $0x778] sm:$0xff]
      %v557 = vld [vmem:[%s291 + $0x780] sm:$0xff]
      %v558 = vld [vmem:[%s291 + $0x788] sm:$0xff]
      %v559 = vld [vmem:[%s291 + $0x790] sm:$0xff]
      %v560 = vld [vmem:[%s291 + $0x798] sm:$0xff]
      %v561 = vld [vmem:[%s291 + $0x7a0] sm:$0xff]
      %v562 = vld [vmem:[%s291 + $0x7a8] sm:$0xff]
      %v563 = vld [vmem:[%s291 + $0x7b0] sm:$0xff]
      %v564 = vld [vmem:[%s291 + $0x7b8] sm:$0xff]
      %v565 = vld [vmem:[%s291 + $0x7c0] sm:$0xff]
      %v566 = vld [vmem:[%s291 + $0x7c8] sm:$0xff]
      %v567 = vld [vmem:[%s291 + $0x7d0] sm:$0xff]
      %v568 = vld [vmem:[%s291 + $0x7d8] sm:$0xff]
      %v569 = vld [vmem:[%s291 + $0x7e0] sm:$0xff]
      %v570 = vld [vmem:[%s291 + $0x7e8] sm:$0xff]
      %v571 = vld [vmem:[%s291 + $0x7f0] sm:$0xff]
      %v572 = vld [vmem:[%s291 + $0x7f8] sm:$0xff]
      %v573 = vld [vmem:[%s295] sm:$0xff]
      %v575 = vperm.slane %v573, 0
      %v576 = vperm.slane %v573, 1
      %v577 = vperm.slane %v573, 2
      %v578 = vperm.slane %v573, 3
      %v579 = vperm.slane %v573, 4
      %v580 = vperm.slane %v573, 5
      %v581 = vperm.slane %v573, 6
      %v582 = vperm.slane %v573, 7
      %591 = vmatpush.msra.mxu0 %v437
      %592 = vmatpush.msra.mxu0 %v429
      %593 = vmatpush.msra.mxu0 %v421
      %594 = vmatpush.msra.mxu0 %v413
      %595 = vmatpush.msra.mxu0 %v405
      %596 = vmatpush.msra.mxu0 %v397
      %597 = vmatpush.msra.mxu0 %v389
      %598 = vmatpush.msra.mxu0 %v381
      %599 = vmatpush.msra.mxu0 %v373
      %600 = vmatpush.msra.mxu0 %v365
      %601 = vmatpush.msra.mxu0 %v357
      %602 = vmatpush.msra.mxu0 %v349
      %603 = vmatpush.msra.mxu0 %v341
      %604 = vmatpush.msra.mxu0 %v333
      %605 = vmatpush.msra.mxu0 %v325
      %606 = vmatpush.msra.mxu0 %v317
      %607 = vmatmul.f32.gmra.mxu0 %v313
      %v608 = vpop.f32.mrf.mxu0
      %v609 = vadd.f32 %v575, %v608
      %610 = vmatmul.f32.gmra.mxu0 %v315
      %v611 = vpop.f32.mrf.mxu0
      %v612 = vadd.f32 %v575, %v611
      %613 = vdwg.mxu0
      %614 = vmatpush.msra.mxu0 %v565
      %615 = vmatpush.msra.mxu0 %v557
      %616 = vmatpush.msra.mxu0 %v549
      %617 = vmatpush.msra.mxu0 %v541
      %618 = vmatpush.msra.mxu0 %v533
      %619 = vmatpush.msra.mxu0 %v525
      %620 = vmatpush.msra.mxu0 %v517
      %621 = vmatpush.msra.mxu0 %v509
      %622 = vmatpush.msra.mxu0 %v501
      %623 = vmatpush.msra.mxu0 %v493
      %624 = vmatpush.msra.mxu0 %v485
      %625 = vmatpush.msra.mxu0 %v477
      %626 = vmatpush.msra.mxu0 %v469
      %627 = vmatpush.msra.mxu0 %v461
      %628 = vmatpush.msra.mxu0 %v453
      %629 = vmatpush.msra.mxu0 %v445
      %630 = vmatmul.f32.gmra.mxu0 %v314
      %v631 = vpop.f32.mrf.mxu0
      %v632 = vadd.f32 %v609, %v631
      %633 = vmatmul.f32.gmra.mxu0 %v316
      %v634 = vpop.f32.mrf.mxu0
      %v635 = vadd.f32 %v612, %v634
      %636 = vdwg.mxu0
      %637 = vmatpush.msra.mxu0 %v438
      %638 = vmatpush.msra.mxu0 %v430
      %639 = vmatpush.msra.mxu0 %v422
      %640 = vmatpush.msra.mxu0 %v414
      %641 = vmatpush.msra.mxu0 %v406
      %642 = vmatpush.msra.mxu0 %v398
      %643 = vmatpush.msra.mxu0 %v390
      %644 = vmatpush.msra.mxu0 %v382
      %645 = vmatpush.msra.mxu0 %v374
      %646 = vmatpush.msra.mxu0 %v366
      %647 = vmatpush.msra.mxu0 %v358
      %648 = vmatpush.msra.mxu0 %v350
      %649 = vmatpush.msra.mxu0 %v342
      %650 = vmatpush.msra.mxu0 %v334
      %651 = vmatpush.msra.mxu0 %v326
      %652 = vmatpush.msra.mxu0 %v318
      %653 = vmatmul.f32.gmra.mxu0 %v313
      %v654 = vpop.f32.mrf.mxu0
      %v655 = vadd.f32 %v576, %v654
      %656 = vmatmul.f32.gmra.mxu0 %v315
      %v657 = vpop.f32.mrf.mxu0
      %v658 = vadd.f32 %v576, %v657
      %659 = vdwg.mxu0
      %660 = vmatpush.msra.mxu0 %v566
      %661 = vmatpush.msra.mxu0 %v558
      %662 = vmatpush.msra.mxu0 %v550
      %663 = vmatpush.msra.mxu0 %v542
      %664 = vmatpush.msra.mxu0 %v534
      %665 = vmatpush.msra.mxu0 %v526
      %666 = vmatpush.msra.mxu0 %v518
      %667 = vmatpush.msra.mxu0 %v510
      %668 = vmatpush.msra.mxu0 %v502
      %669 = vmatpush.msra.mxu0 %v494
      %670 = vmatpush.msra.mxu0 %v486
      %671 = vmatpush.msra.mxu0 %v478
      %672 = vmatpush.msra.mxu0 %v470
      %673 = vmatpush.msra.mxu0 %v462
      %674 = vmatpush.msra.mxu0 %v454
      %675 = vmatpush.msra.mxu0 %v446
      %676 = vmatmul.f32.gmra.mxu0 %v314
      %v677 = vpop.f32.mrf.mxu0
      %v678 = vadd.f32 %v655, %v677
      %679 = vmatmul.f32.gmra.mxu0 %v316
      %v680 = vpop.f32.mrf.mxu0
      %v681 = vadd.f32 %v658, %v680
      %682 = vdwg.mxu0
      %683 = vmatpush.msra.mxu0 %v439
      %684 = vmatpush.msra.mxu0 %v431
      %685 = vmatpush.msra.mxu0 %v423
      %686 = vmatpush.msra.mxu0 %v415
      %687 = vmatpush.msra.mxu0 %v407
      %688 = vmatpush.msra.mxu0 %v399
      %689 = vmatpush.msra.mxu0 %v391
      %690 = vmatpush.msra.mxu0 %v383
      %691 = vmatpush.msra.mxu0 %v375
      %692 = vmatpush.msra.mxu0 %v367
      %693 = vmatpush.msra.mxu0 %v359
      %694 = vmatpush.msra.mxu0 %v351
      %695 = vmatpush.msra.mxu0 %v343
      %696 = vmatpush.msra.mxu0 %v335
      %697 = vmatpush.msra.mxu0 %v327
      %698 = vmatpush.msra.mxu0 %v319
      %699 = vmatmul.f32.gmra.mxu0 %v313
      %v700 = vpop.f32.mrf.mxu0
      %v701 = vadd.f32 %v577, %v700
      %702 = vmatmul.f32.gmra.mxu0 %v315
      %v703 = vpop.f32.mrf.mxu0
      %v704 = vadd.f32 %v577, %v703
      %705 = vdwg.mxu0
      %706 = vmatpush.msra.mxu0 %v567
      %707 = vmatpush.msra.mxu0 %v559
      %708 = vmatpush.msra.mxu0 %v551
      %709 = vmatpush.msra.mxu0 %v543
      %710 = vmatpush.msra.mxu0 %v535
      %711 = vmatpush.msra.mxu0 %v527
      %712 = vmatpush.msra.mxu0 %v519
      %713 = vmatpush.msra.mxu0 %v511
      %714 = vmatpush.msra.mxu0 %v503
      %715 = vmatpush.msra.mxu0 %v495
      %716 = vmatpush.msra.mxu0 %v487
      %717 = vmatpush.msra.mxu0 %v479
      %718 = vmatpush.msra.mxu0 %v471
      %719 = vmatpush.msra.mxu0 %v463
      %720 = vmatpush.msra.mxu0 %v455
      %721 = vmatpush.msra.mxu0 %v447
      %722 = vmatmul.f32.gmra.mxu0 %v314
      %v723 = vpop.f32.mrf.mxu0
      %v724 = vadd.f32 %v701, %v723
      %725 = vmatmul.f32.gmra.mxu0 %v316
      %v726 = vpop.f32.mrf.mxu0
      %v727 = vadd.f32 %v704, %v726
      %728 = vdwg.mxu0
      %729 = vmatpush.msra.mxu0 %v440
      %730 = vmatpush.msra.mxu0 %v432
      %731 = vmatpush.msra.mxu0 %v424
      %732 = vmatpush.msra.mxu0 %v416
      %733 = vmatpush.msra.mxu0 %v408
      %734 = vmatpush.msra.mxu0 %v400
      %735 = vmatpush.msra.mxu0 %v392
      %736 = vmatpush.msra.mxu0 %v384
      %737 = vmatpush.msra.mxu0 %v376
      %738 = vmatpush.msra.mxu0 %v368
      %739 = vmatpush.msra.mxu0 %v360
      %740 = vmatpush.msra.mxu0 %v352
      %741 = vmatpush.msra.mxu0 %v344
      %742 = vmatpush.msra.mxu0 %v336
      %743 = vmatpush.msra.mxu0 %v328
      %744 = vmatpush.msra.mxu0 %v320
      %745 = vmatmul.f32.gmra.mxu0 %v313
      %v746 = vpop.f32.mrf.mxu0
      %v747 = vadd.f32 %v578, %v746
      %748 = vmatmul.f32.gmra.mxu0 %v315
      %v749 = vpop.f32.mrf.mxu0
      %v750 = vadd.f32 %v578, %v749
      %751 = vdwg.mxu0
      %752 = vmatpush.msra.mxu0 %v568
      %753 = vmatpush.msra.mxu0 %v560
      %754 = vmatpush.msra.mxu0 %v552
      %755 = vmatpush.msra.mxu0 %v544
      %756 = vmatpush.msra.mxu0 %v536
      %757 = vmatpush.msra.mxu0 %v528
      %758 = vmatpush.msra.mxu0 %v520
      %759 = vmatpush.msra.mxu0 %v512
      %760 = vmatpush.msra.mxu0 %v504
      %761 = vmatpush.msra.mxu0 %v496
      %762 = vmatpush.msra.mxu0 %v488
      %763 = vmatpush.msra.mxu0 %v480
      %764 = vmatpush.msra.mxu0 %v472
      %765 = vmatpush.msra.mxu0 %v464
      %766 = vmatpush.msra.mxu0 %v456
      %767 = vmatpush.msra.mxu0 %v448
      %768 = vmatmul.f32.gmra.mxu0 %v314
      %v769 = vpop.f32.mrf.mxu0
      %v770 = vadd.f32 %v747, %v769
      %771 = vmatmul.f32.gmra.mxu0 %v316
      %v772 = vpop.f32.mrf.mxu0
      %v773 = vadd.f32 %v750, %v772
      %774 = vdwg.mxu0
      %775 = vmatpush.msra.mxu0 %v441
      %776 = vmatpush.msra.mxu0 %v433
      %777 = vmatpush.msra.mxu0 %v425
      %778 = vmatpush.msra.mxu0 %v417
      %779 = vmatpush.msra.mxu0 %v409
      %780 = vmatpush.msra.mxu0 %v401
      %781 = vmatpush.msra.mxu0 %v393
      %782 = vmatpush.msra.mxu0 %v385
      %783 = vmatpush.msra.mxu0 %v377
      %784 = vmatpush.msra.mxu0 %v369
      %785 = vmatpush.msra.mxu0 %v361
      %786 = vmatpush.msra.mxu0 %v353
      %787 = vmatpush.msra.mxu0 %v345
      %788 = vmatpush.msra.mxu0 %v337
      %789 = vmatpush.msra.mxu0 %v329
      %790 = vmatpush.msra.mxu0 %v321
      %791 = vmatmul.f32.gmra.mxu0 %v313
      %v792 = vpop.f32.mrf.mxu0
      %v793 = vadd.f32 %v579, %v792
      %794 = vmatmul.f32.gmra.mxu0 %v315
      %v795 = vpop.f32.mrf.mxu0
      %v796 = vadd.f32 %v579, %v795
      %797 = vdwg.mxu0
      %798 = vmatpush.msra.mxu0 %v569
      %799 = vmatpush.msra.mxu0 %v561
      %800 = vmatpush.msra.mxu0 %v553
      %801 = vmatpush.msra.mxu0 %v545
      %802 = vmatpush.msra.mxu0 %v537
      %803 = vmatpush.msra.mxu0 %v529
      %804 = vmatpush.msra.mxu0 %v521
      %805 = vmatpush.msra.mxu0 %v513
      %806 = vmatpush.msra.mxu0 %v505
      %807 = vmatpush.msra.mxu0 %v497
      %808 = vmatpush.msra.mxu0 %v489
      %809 = vmatpush.msra.mxu0 %v481
      %810 = vmatpush.msra.mxu0 %v473
      %811 = vmatpush.msra.mxu0 %v465
      %812 = vmatpush.msra.mxu0 %v457
      %813 = vmatpush.msra.mxu0 %v449
      %814 = vmatmul.f32.gmra.mxu0 %v314
      %v815 = vpop.f32.mrf.mxu0
      %v816 = vadd.f32 %v793, %v815
      %817 = vmatmul.f32.gmra.mxu0 %v316
      %v818 = vpop.f32.mrf.mxu0
      %v819 = vadd.f32 %v796, %v818
      %820 = vdwg.mxu0
      %821 = vmatpush.msra.mxu0 %v442
      %822 = vmatpush.msra.mxu0 %v434
      %823 = vmatpush.msra.mxu0 %v426
      %824 = vmatpush.msra.mxu0 %v418
      %825 = vmatpush.msra.mxu0 %v410
      %826 = vmatpush.msra.mxu0 %v402
      %827 = vmatpush.msra.mxu0 %v394
      %828 = vmatpush.msra.mxu0 %v386
      %829 = vmatpush.msra.mxu0 %v378
      %830 = vmatpush.msra.mxu0 %v370
      %831 = vmatpush.msra.mxu0 %v362
      %832 = vmatpush.msra.mxu0 %v354
      %833 = vmatpush.msra.mxu0 %v346
      %834 = vmatpush.msra.mxu0 %v338
      %835 = vmatpush.msra.mxu0 %v330
      %836 = vmatpush.msra.mxu0 %v322
      %837 = vmatmul.f32.gmra.mxu0 %v313
      %v838 = vpop.f32.mrf.mxu0
      %v839 = vadd.f32 %v580, %v838
      %840 = vmatmul.f32.gmra.mxu0 %v315
      %v841 = vpop.f32.mrf.mxu0
      %v842 = vadd.f32 %v580, %v841
      %843 = vdwg.mxu0
      %844 = vmatpush.msra.mxu0 %v570
      %845 = vmatpush.msra.mxu0 %v562
      %846 = vmatpush.msra.mxu0 %v554
      %847 = vmatpush.msra.mxu0 %v546
      %848 = vmatpush.msra.mxu0 %v538
      %849 = vmatpush.msra.mxu0 %v530
      %850 = vmatpush.msra.mxu0 %v522
      %851 = vmatpush.msra.mxu0 %v514
      %852 = vmatpush.msra.mxu0 %v506
      %853 = vmatpush.msra.mxu0 %v498
      %854 = vmatpush.msra.mxu0 %v490
      %855 = vmatpush.msra.mxu0 %v482
      %856 = vmatpush.msra.mxu0 %v474
      %857 = vmatpush.msra.mxu0 %v466
      %858 = vmatpush.msra.mxu0 %v458
      %859 = vmatpush.msra.mxu0 %v450
      %860 = vmatmul.f32.gmra.mxu0 %v314
      %v861 = vpop.f32.mrf.mxu0
      %v862 = vadd.f32 %v839, %v861
      %863 = vmatmul.f32.gmra.mxu0 %v316
      %v864 = vpop.f32.mrf.mxu0
      %v865 = vadd.f32 %v842, %v864
      %866 = vdwg.mxu0
      %867 = vmatpush.msra.mxu0 %v443
      %868 = vmatpush.msra.mxu0 %v435
      %869 = vmatpush.msra.mxu0 %v427
      %870 = vmatpush.msra.mxu0 %v419
      %871 = vmatpush.msra.mxu0 %v411
      %872 = vmatpush.msra.mxu0 %v403
      %873 = vmatpush.msra.mxu0 %v395
      %874 = vmatpush.msra.mxu0 %v387
      %875 = vmatpush.msra.mxu0 %v379
      %876 = vmatpush.msra.mxu0 %v371
      %877 = vmatpush.msra.mxu0 %v363
      %878 = vmatpush.msra.mxu0 %v355
      %879 = vmatpush.msra.mxu0 %v347
      %880 = vmatpush.msra.mxu0 %v339
      %881 = vmatpush.msra.mxu0 %v331
      %882 = vmatpush.msra.mxu0 %v323
      %883 = vmatmul.f32.gmra.mxu0 %v313
      %v884 = vpop.f32.mrf.mxu0
      %v885 = vadd.f32 %v581, %v884
      %886 = vmatmul.f32.gmra.mxu0 %v315
      %v887 = vpop.f32.mrf.mxu0
      %v888 = vadd.f32 %v581, %v887
      %889 = vdwg.mxu0
      %890 = vmatpush.msra.mxu0 %v571
      %891 = vmatpush.msra.mxu0 %v563
      %892 = vmatpush.msra.mxu0 %v555
      %893 = vmatpush.msra.mxu0 %v547
      %894 = vmatpush.msra.mxu0 %v539
      %895 = vmatpush.msra.mxu0 %v531
      %896 = vmatpush.msra.mxu0 %v523
      %897 = vmatpush.msra.mxu0 %v515
      %898 = vmatpush.msra.mxu0 %v507
      %899 = vmatpush.msra.mxu0 %v499
      %900 = vmatpush.msra.mxu0 %v491
      %901 = vmatpush.msra.mxu0 %v483
      %902 = vmatpush.msra.mxu0 %v475
      %903 = vmatpush.msra.mxu0 %v467
      %904 = vmatpush.msra.mxu0 %v459
      %905 = vmatpush.msra.mxu0 %v451
      %906 = vmatmul.f32.gmra.mxu0 %v314
      %v907 = vpop.f32.mrf.mxu0
      %v908 = vadd.f32 %v885, %v907
      %909 = vmatmul.f32.gmra.mxu0 %v316
      %v910 = vpop.f32.mrf.mxu0
      %v911 = vadd.f32 %v888, %v910
      %912 = vdwg.mxu0
      %913 = vmatpush.msra.mxu0 %v444
      %914 = vmatpush.msra.mxu0 %v436
      %915 = vmatpush.msra.mxu0 %v428
      %916 = vmatpush.msra.mxu0 %v420
      %917 = vmatpush.msra.mxu0 %v412
      %918 = vmatpush.msra.mxu0 %v404
      %919 = vmatpush.msra.mxu0 %v396
      %920 = vmatpush.msra.mxu0 %v388
      %921 = vmatpush.msra.mxu0 %v380
      %922 = vmatpush.msra.mxu0 %v372
      %923 = vmatpush.msra.mxu0 %v364
      %924 = vmatpush.msra.mxu0 %v356
      %925 = vmatpush.msra.mxu0 %v348
      %926 = vmatpush.msra.mxu0 %v340
      %927 = vmatpush.msra.mxu0 %v332
      %928 = vmatpush.msra.mxu0 %v324
      %929 = vmatmul.f32.gmra.mxu0 %v313
      %v930 = vpop.f32.mrf.mxu0
      %v931 = vadd.f32 %v582, %v930
      %932 = vmatmul.f32.gmra.mxu0 %v315
      %v933 = vpop.f32.mrf.mxu0
      %v934 = vadd.f32 %v582, %v933
      %935 = vdwg.mxu0
      %936 = vmatpush.msra.mxu0 %v572
      %937 = vmatpush.msra.mxu0 %v564
      %938 = vmatpush.msra.mxu0 %v556
      %939 = vmatpush.msra.mxu0 %v548
      %940 = vmatpush.msra.mxu0 %v540
      %941 = vmatpush.msra.mxu0 %v532
      %942 = vmatpush.msra.mxu0 %v524
      %943 = vmatpush.msra.mxu0 %v516
      %944 = vmatpush.msra.mxu0 %v508
      %945 = vmatpush.msra.mxu0 %v500
      %946 = vmatpush.msra.mxu0 %v492
      %947 = vmatpush.msra.mxu0 %v484
      %948 = vmatpush.msra.mxu0 %v476
      %949 = vmatpush.msra.mxu0 %v468
      %950 = vmatpush.msra.mxu0 %v460
      %951 = vmatpush.msra.mxu0 %v452
      %952 = vmatmul.f32.gmra.mxu0 %v314
      %v953 = vpop.f32.mrf.mxu0
      %v954 = vadd.f32 %v931, %v953
      %955 = vmatmul.f32.gmra.mxu0 %v316
      %v956 = vpop.f32.mrf.mxu0
      %v957 = vadd.f32 %v934, %v956
      %958 = vdwg.mxu0
      %v959 = vld [vmem:[%s3] sm:$0xff]
      %v960 = vld [vmem:[%s3 + $0x8] sm:$0xff]
      %v961 = vld [vmem:[%s3 + $0x10] sm:$0xff]
      %v962 = vld [vmem:[%s3 + $0x18] sm:$0xff]
      %v963 = vld [vmem:[%s3 + $0x20] sm:$0xff]
      %v964 = vld [vmem:[%s3 + $0x28] sm:$0xff]
      %v965 = vld [vmem:[%s3 + $0x30] sm:$0xff]
      %v966 = vld [vmem:[%s3 + $0x38] sm:$0xff]
      %v967 = vld [vmem:[%s300] sm:$0xff]
      %v968 = vld [vmem:[%s300 + $0x8] sm:$0xff]
      %v969 = vld [vmem:[%s300 + $0x10] sm:$0xff]
      %v970 = vld [vmem:[%s300 + $0x18] sm:$0xff]
      %v971 = vld [vmem:[%s300 + $0x20] sm:$0xff]
      %v972 = vld [vmem:[%s300 + $0x28] sm:$0xff]
      %v973 = vld [vmem:[%s300 + $0x30] sm:$0xff]
      %v974 = vld [vmem:[%s300 + $0x38] sm:$0xff]
      %v975 = vld [vmem:[%s300 + $0x40] sm:$0xff]
      %v976 = vld [vmem:[%s300 + $0x48] sm:$0xff]
      %v977 = vld [vmem:[%s300 + $0x50] sm:$0xff]
      %v978 = vld [vmem:[%s300 + $0x58] sm:$0xff]
      %vm979 = vcmask 392192
      %v981 = vsel %vm979, %v959, 0
      %v984 = vsel %vm979, %v960, 0
      %v987 = vsel %vm979, %v961, 0
      %v990 = vsel %vm979, %v962, 0
      %v993 = vsel %vm979, %v963, 0
      %v996 = vsel %vm979, %v964, 0
      %v999 = vsel %vm979, %v965, 0
      %v1002 = vsel %vm979, %v966, 0
      %1004 = vmatpush.msra.mxu0 0.0
      %1005 = vmatpush.msra.mxu0 0.0
      %1006 = vmatpush.msra.mxu0 0.0
      %1007 = vmatpush.msra.mxu0 0.0
      %1008 = vmatpush.msra.mxu0 0.0
      %1009 = vmatpush.msra.mxu0 0.0
      %1010 = vmatpush.msra.mxu0 0.0
      %1011 = vmatpush.msra.mxu0 0.0
      %1012 = vmatpush.msra.mxu0 0.0
      %1013 = vmatpush.msra.mxu0 0.0
      %1014 = vmatpush.msra.mxu0 %v977
      %1015 = vmatpush.msra.mxu0 %v975
      %1016 = vmatpush.msra.mxu0 %v973
      %1017 = vmatpush.msra.mxu0 %v971
      %1018 = vmatpush.msra.mxu0 %v969
      %1019 = vmatpush.msra.mxu0 %v967
      %1020 = vmatmul.f32.gmra.mxu0 %v981
      %v1021 = vpop.f32.mrf.mxu0
      %v1022 = vadd.f32 0.0, %v1021
      %1023 = vmatmul.f32.gmra.mxu0 %v984
      %v1024 = vpop.f32.mrf.mxu0
      %v1025 = vadd.f32 0.0, %v1024
      %1026 = vmatmul.f32.gmra.mxu0 %v987
      %v1027 = vpop.f32.mrf.mxu0
      %v1028 = vadd.f32 0.0, %v1027
      %1029 = vmatmul.f32.gmra.mxu0 %v990
      %v1030 = vpop.f32.mrf.mxu0
      %v1031 = vadd.f32 0.0, %v1030
      %1032 = vmatmul.f32.gmra.mxu0 %v993
      %v1033 = vpop.f32.mrf.mxu0
      %v1034 = vadd.f32 0.0, %v1033
      %1035 = vmatmul.f32.gmra.mxu0 %v996
      %v1036 = vpop.f32.mrf.mxu0
      %v1037 = vadd.f32 0.0, %v1036
      %1038 = vmatmul.f32.gmra.mxu0 %v999
      %v1039 = vpop.f32.mrf.mxu0
      %v1040 = vadd.f32 0.0, %v1039
      %1041 = vmatmul.f32.gmra.mxu0 %v1002
      %v1042 = vpop.f32.mrf.mxu0
      %v1043 = vadd.f32 0.0, %v1042
      %1044 = vdwg.mxu0
      %1045 = vmatpush.msra.mxu0 0.0
      %1046 = vmatpush.msra.mxu0 0.0
      %1047 = vmatpush.msra.mxu0 0.0
      %1048 = vmatpush.msra.mxu0 0.0
      %1049 = vmatpush.msra.mxu0 0.0
      %1050 = vmatpush.msra.mxu0 0.0
      %1051 = vmatpush.msra.mxu0 0.0
      %1052 = vmatpush.msra.mxu0 0.0
      %1053 = vmatpush.msra.mxu0 0.0
      %1054 = vmatpush.msra.mxu0 0.0
      %1055 = vmatpush.msra.mxu0 %v978
      %1056 = vmatpush.msra.mxu0 %v976
      %1057 = vmatpush.msra.mxu0 %v974
      %1058 = vmatpush.msra.mxu0 %v972
      %1059 = vmatpush.msra.mxu0 %v970
      %1060 = vmatpush.msra.mxu0 %v968
      %1061 = vmatmul.f32.gmra.mxu0 %v981
      %v1062 = vpop.f32.mrf.mxu0
      %v1063 = vadd.f32 0.0, %v1062
      %1064 = vmatmul.f32.gmra.mxu0 %v984
      %v1065 = vpop.f32.mrf.mxu0
      %v1066 = vadd.f32 0.0, %v1065
      %1067 = vmatmul.f32.gmra.mxu0 %v987
      %v1068 = vpop.f32.mrf.mxu0
      %v1069 = vadd.f32 0.0, %v1068
      %1070 = vmatmul.f32.gmra.mxu0 %v990
      %v1071 = vpop.f32.mrf.mxu0
      %v1072 = vadd.f32 0.0, %v1071
      %1073 = vmatmul.f32.gmra.mxu0 %v993
      %v1074 = vpop.f32.mrf.mxu0
      %v1075 = vadd.f32 0.0, %v1074
      %1076 = vmatmul.f32.gmra.mxu0 %v996
      %v1077 = vpop.f32.mrf.mxu0
      %v1078 = vadd.f32 0.0, %v1077
      %1079 = vmatmul.f32.gmra.mxu0 %v999
      %v1080 = vpop.f32.mrf.mxu0
      %v1081 = vadd.f32 0.0, %v1080
      %1082 = vmatmul.f32.gmra.mxu0 %v1002
      %v1083 = vpop.f32.mrf.mxu0
      %v1084 = vadd.f32 0.0, %v1083
      %1085 = vdwg.mxu0
      %v1086 = vld [vmem:[%s1] sm:$0xff]
      %v1087 = vld [vmem:[%s1 + $0x8] sm:$0xff]
      %v1088 = vld [vmem:[%s1 + $0x10] sm:$0xff]
      %v1089 = vld [vmem:[%s1 + $0x18] sm:$0xff]
      %v1090 = vld [vmem:[%s1 + $0x20] sm:$0xff]
      %v1091 = vld [vmem:[%s1 + $0x28] sm:$0xff]
      %v1092 = vld [vmem:[%s1 + $0x30] sm:$0xff]
      %v1093 = vld [vmem:[%s1 + $0x38] sm:$0xff]
      %vm1094 = vcmask 130048
      %v1096 = vsel %vm1094, %v1086, 0
      %v1099 = vsel %vm1094, %v1087, 0
      %v1102 = vsel %vm1094, %v1088, 0
      %v1105 = vsel %vm1094, %v1089, 0
      %v1108 = vsel %vm1094, %v1090, 0
      %v1111 = vsel %vm1094, %v1091, 0
      %v1114 = vsel %vm1094, %v1092, 0
      %v1117 = vsel %vm1094, %v1093, 0
      %1119 = vmatpush.msra.mxu0 0.0
      %1120 = vmatpush.msra.mxu0 0.0
      %1121 = vmatpush.msra.mxu0 0.0
      %1122 = vmatpush.msra.mxu0 0.0
      %1123 = vmatpush.msra.mxu0 0.0
      %1124 = vmatpush.msra.mxu0 0.0
      %1125 = vmatpush.msra.mxu0 0.0
      %1126 = vmatpush.msra.mxu0 0.0
      %1127 = vmatpush.msra.mxu0 0.0
      %1128 = vmatpush.msra.mxu0 0.0
      %1129 = vmatpush.msra.mxu0 0.0
      %1130 = vmatpush.msra.mxu0 0.0
      %1131 = vmatpush.msra.mxu0 0.0
      %1132 = vmatpush.msra.mxu0 0.0
      %1133 = vmatpush.msra.mxu0 %v727
      %1134 = vmatpush.msra.mxu0 %v724
      %1135 = vmatmul.f32.gmra.mxu0 %v1096
      %v1136 = vpop.f32.mrf.mxu0
      %v1137 = vadd.f32 0.0, %v1136
      %1138 = vmatmul.f32.gmra.mxu0 %v1099
      %v1139 = vpop.f32.mrf.mxu0
      %v1140 = vadd.f32 0.0, %v1139
      %1141 = vmatmul.f32.gmra.mxu0 %v1102
      %v1142 = vpop.f32.mrf.mxu0
      %v1143 = vadd.f32 0.0, %v1142
      %1144 = vmatmul.f32.gmra.mxu0 %v1105
      %v1145 = vpop.f32.mrf.mxu0
      %v1146 = vadd.f32 0.0, %v1145
      %1147 = vmatmul.f32.gmra.mxu0 %v1108
      %v1148 = vpop.f32.mrf.mxu0
      %v1149 = vadd.f32 0.0, %v1148
      %1150 = vmatmul.f32.gmra.mxu0 %v1111
      %v1151 = vpop.f32.mrf.mxu0
      %v1152 = vadd.f32 0.0, %v1151
      %1153 = vmatmul.f32.gmra.mxu0 %v1114
      %v1154 = vpop.f32.mrf.mxu0
      %v1155 = vadd.f32 0.0, %v1154
      %1156 = vmatmul.f32.gmra.mxu0 %v1117
      %v1157 = vpop.f32.mrf.mxu0
      %v1158 = vadd.f32 0.0, %v1157
      %1159 = vdwg.mxu0
      %1160 = vmatpush.msra.mxu0 0.0
      %1161 = vmatpush.msra.mxu0 0.0
      %1162 = vmatpush.msra.mxu0 0.0
      %1163 = vmatpush.msra.mxu0 0.0
      %1164 = vmatpush.msra.mxu0 0.0
      %1165 = vmatpush.msra.mxu0 0.0
      %1166 = vmatpush.msra.mxu0 0.0
      %1167 = vmatpush.msra.mxu0 0.0
      %1168 = vmatpush.msra.mxu0 0.0
      %1169 = vmatpush.msra.mxu0 0.0
      %1170 = vmatpush.msra.mxu0 0.0
      %1171 = vmatpush.msra.mxu0 0.0
      %1172 = vmatpush.msra.mxu0 0.0
      %1173 = vmatpush.msra.mxu0 0.0
      %1174 = vmatpush.msra.mxu0 %v773
      %1175 = vmatpush.msra.mxu0 %v770
      %1176 = vmatmul.f32.gmra.mxu0 %v1096
      %v1177 = vpop.f32.mrf.mxu0
      %v1178 = vadd.f32 0.0, %v1177
      %1179 = vmatmul.f32.gmra.mxu0 %v1099
      %v1180 = vpop.f32.mrf.mxu0
      %v1181 = vadd.f32 0.0, %v1180
      %1182 = vmatmul.f32.gmra.mxu0 %v1102
      %v1183 = vpop.f32.mrf.mxu0
      %v1184 = vadd.f32 0.0, %v1183
      %1185 = vmatmul.f32.gmra.mxu0 %v1105
      %v1186 = vpop.f32.mrf.mxu0
      %v1187 = vadd.f32 0.0, %v1186
      %1188 = vmatmul.f32.gmra.mxu0 %v1108
      %v1189 = vpop.f32.mrf.mxu0
      %v1190 = vadd.f32 0.0, %v1189
      %1191 = vmatmul.f32.gmra.mxu0 %v1111
      %v1192 = vpop.f32.mrf.mxu0
      %v1193 = vadd.f32 0.0, %v1192
      %1194 = vmatmul.f32.gmra.mxu0 %v1114
      %v1195 = vpop.f32.mrf.mxu0
      %v1196 = vadd.f32 0.0, %v1195
      %1197 = vmatmul.f32.gmra.mxu0 %v1117
      %v1198 = vpop.f32.mrf.mxu0
      %v1199 = vadd.f32 0.0, %v1198
      %1200 = vdwg.mxu0
      %1201 = vmatpush.msra.mxu0 0.0
      %1202 = vmatpush.msra.mxu0 0.0
      %1203 = vmatpush.msra.mxu0 0.0
      %1204 = vmatpush.msra.mxu0 0.0
      %1205 = vmatpush.msra.mxu0 0.0
      %1206 = vmatpush.msra.mxu0 0.0
      %1207 = vmatpush.msra.mxu0 0.0
      %1208 = vmatpush.msra.mxu0 0.0
      %1209 = vmatpush.msra.mxu0 0.0
      %1210 = vmatpush.msra.mxu0 0.0
      %1211 = vmatpush.msra.mxu0 0.0
      %1212 = vmatpush.msra.mxu0 0.0
      %1213 = vmatpush.msra.mxu0 0.0
      %1214 = vmatpush.msra.mxu0 0.0
      %1215 = vmatpush.msra.mxu0 %v819
      %1216 = vmatpush.msra.mxu0 %v816
      %1217 = vmatmul.f32.gmra.mxu0 %v1096
      %v1218 = vpop.f32.mrf.mxu0
      %v1219 = vadd.f32 0.0, %v1218
      %1220 = vmatmul.f32.gmra.mxu0 %v1099
      %v1221 = vpop.f32.mrf.mxu0
      %v1222 = vadd.f32 0.0, %v1221
      %1223 = vmatmul.f32.gmra.mxu0 %v1102
      %v1224 = vpop.f32.mrf.mxu0
      %v1225 = vadd.f32 0.0, %v1224
      %1226 = vmatmul.f32.gmra.mxu0 %v1105
      %v1227 = vpop.f32.mrf.mxu0
      %v1228 = vadd.f32 0.0, %v1227
      %1229 = vmatmul.f32.gmra.mxu0 %v1108
      %v1230 = vpop.f32.mrf.mxu0
      %v1231 = vadd.f32 0.0, %v1230
      %1232 = vmatmul.f32.gmra.mxu0 %v1111
      %v1233 = vpop.f32.mrf.mxu0
      %v1234 = vadd.f32 0.0, %v1233
      %1235 = vmatmul.f32.gmra.mxu0 %v1114
      %v1236 = vpop.f32.mrf.mxu0
      %v1237 = vadd.f32 0.0, %v1236
      %1238 = vmatmul.f32.gmra.mxu0 %v1117
      %v1239 = vpop.f32.mrf.mxu0
      %v1240 = vadd.f32 0.0, %v1239
      %1241 = vdwg.mxu0
      %1242 = vmatpush.msra.mxu0 0.0
      %1243 = vmatpush.msra.mxu0 0.0
      %1244 = vmatpush.msra.mxu0 0.0
      %1245 = vmatpush.msra.mxu0 0.0
      %1246 = vmatpush.msra.mxu0 0.0
      %1247 = vmatpush.msra.mxu0 0.0
      %1248 = vmatpush.msra.mxu0 0.0
      %1249 = vmatpush.msra.mxu0 0.0
      %1250 = vmatpush.msra.mxu0 0.0
      %1251 = vmatpush.msra.mxu0 0.0
      %1252 = vmatpush.msra.mxu0 0.0
      %1253 = vmatpush.msra.mxu0 0.0
      %1254 = vmatpush.msra.mxu0 0.0
      %1255 = vmatpush.msra.mxu0 0.0
      %1256 = vmatpush.msra.mxu0 %v865
      %1257 = vmatpush.msra.mxu0 %v862
      %1258 = vmatmul.f32.gmra.mxu0 %v1096
      %v1259 = vpop.f32.mrf.mxu0
      %v1260 = vadd.f32 0.0, %v1259
      %1261 = vmatmul.f32.gmra.mxu0 %v1099
      %v1262 = vpop.f32.mrf.mxu0
      %v1263 = vadd.f32 0.0, %v1262
      %1264 = vmatmul.f32.gmra.mxu0 %v1102
      %v1265 = vpop.f32.mrf.mxu0
      %v1266 = vadd.f32 0.0, %v1265
      %1267 = vmatmul.f32.gmra.mxu0 %v1105
      %v1268 = vpop.f32.mrf.mxu0
      %v1269 = vadd.f32 0.0, %v1268
      %1270 = vmatmul.f32.gmra.mxu0 %v1108
      %v1271 = vpop.f32.mrf.mxu0
      %v1272 = vadd.f32 0.0, %v1271
      %1273 = vmatmul.f32.gmra.mxu0 %v1111
      %v1274 = vpop.f32.mrf.mxu0
      %v1275 = vadd.f32 0.0, %v1274
      %1276 = vmatmul.f32.gmra.mxu0 %v1114
      %v1277 = vpop.f32.mrf.mxu0
      %v1278 = vadd.f32 0.0, %v1277
      %1279 = vmatmul.f32.gmra.mxu0 %v1117
      %v1280 = vpop.f32.mrf.mxu0
      %v1281 = vadd.f32 0.0, %v1280
      %1282 = vdwg.mxu0
      %v1283 = vadd.f32 %v1137, %v1022
      %v1284 = vadd.f32 %v1178, %v1063
      %v1285 = vadd.f32 %v1140, %v1025
      %v1286 = vadd.f32 %v1181, %v1066
      %v1287 = vadd.f32 %v1143, %v1028
      %v1288 = vadd.f32 %v1184, %v1069
      %v1289 = vadd.f32 %v1146, %v1031
      %v1290 = vadd.f32 %v1187, %v1072
      %v1291 = vadd.f32 %v1149, %v1034
      %v1292 = vadd.f32 %v1190, %v1075
      %v1293 = vadd.f32 %v1152, %v1037
      %v1294 = vadd.f32 %v1193, %v1078
      %v1295 = vadd.f32 %v1155, %v1040
      %v1296 = vadd.f32 %v1196, %v1081
      %v1297 = vadd.f32 %v1158, %v1043
      %v1298 = vadd.f32 %v1199, %v1084
      %v1299 = vadd.f32 %v1219, %v1022
      %v1300 = vadd.f32 %v1260, %v1063
      %v1301 = vadd.f32 %v1222, %v1025
      %v1302 = vadd.f32 %v1263, %v1066
      %v1303 = vadd.f32 %v1225, %v1028
      %v1304 = vadd.f32 %v1266, %v1069
      %v1305 = vadd.f32 %v1228, %v1031
      %v1306 = vadd.f32 %v1269, %v1072
      %v1307 = vadd.f32 %v1231, %v1034
      %v1308 = vadd.f32 %v1272, %v1075
      %v1309 = vadd.f32 %v1234, %v1037
      %v1310 = vadd.f32 %v1275, %v1078
      %v1311 = vadd.f32 %v1237, %v1040
      %v1312 = vadd.f32 %v1278, %v1081
      %v1313 = vadd.f32 %v1240, %v1043
      %v1314 = vadd.f32 %v1281, %v1084
      %1315 = vmatpush.xpose.msra.mxu0 0.0
      %1316 = vmatpush.xpose.msra.mxu0 0.0
      %1317 = vmatpush.xpose.msra.mxu0 0.0
      %1318 = vmatpush.xpose.msra.mxu0 0.0
      %1319 = vmatpush.xpose.msra.mxu0 0.0
      %1320 = vmatpush.xpose.msra.mxu0 0.0
      %1321 = vmatpush.xpose.msra.mxu0 0.0
      %1322 = vmatpush.xpose.msra.mxu0 0.0
      %1323 = vmatpush.xpose.msra.mxu0 %v1297
      %1324 = vmatpush.xpose.msra.mxu0 %v1295
      %1325 = vmatpush.xpose.msra.mxu0 %v1293
      %1326 = vmatpush.xpose.msra.mxu0 %v1291
      %1327 = vmatpush.xpose.msra.mxu0 %v1289
      %1328 = vmatpush.xpose.msra.mxu0 %v1287
      %1329 = vmatpush.xpose.msra.mxu0 %v1285
      %1330 = vmatpush.xpose.msra.mxu0 %v1283
      %1331 = vmatmul.f32.gmra.mxu0 %v632
      %v1332 = vpop.f32.mrf.mxu0
      %v1333 = vadd.f32 0.0, %v1332
      %1334 = vmatmul.f32.gmra.mxu0 %v635
      %v1335 = vpop.f32.mrf.mxu0
      %v1336 = vadd.f32 0.0, %v1335
      %1337 = vdwg.mxu0
      %1338 = vmatpush.xpose.msra.mxu0 0.0
      %1339 = vmatpush.xpose.msra.mxu0 0.0
      %1340 = vmatpush.xpose.msra.mxu0 0.0
      %1341 = vmatpush.xpose.msra.mxu0 0.0
      %1342 = vmatpush.xpose.msra.mxu0 0.0
      %1343 = vmatpush.xpose.msra.mxu0 0.0
      %1344 = vmatpush.xpose.msra.mxu0 0.0
      %1345 = vmatpush.xpose.msra.mxu0 0.0
      %1346 = vmatpush.xpose.msra.mxu0 %v1298
      %1347 = vmatpush.xpose.msra.mxu0 %v1296
      %1348 = vmatpush.xpose.msra.mxu0 %v1294
      %1349 = vmatpush.xpose.msra.mxu0 %v1292
      %1350 = vmatpush.xpose.msra.mxu0 %v1290
      %1351 = vmatpush.xpose.msra.mxu0 %v1288
      %1352 = vmatpush.xpose.msra.mxu0 %v1286
      %1353 = vmatpush.xpose.msra.mxu0 %v1284
      %1354 = vmatmul.f32.gmra.mxu0 %v678
      %v1355 = vpop.f32.mrf.mxu0
      %v1356 = vadd.f32 %v1333, %v1355
      %1357 = vmatmul.f32.gmra.mxu0 %v681
      %v1358 = vpop.f32.mrf.mxu0
      %v1359 = vadd.f32 %v1336, %v1358
      %1360 = vdwg.mxu0
      %v1361 = vld [vmem:[%s2] sm:$0xff]
      %v1362 = vld [vmem:[%s2 + $0x8] sm:$0xff]
      %vm1363 = vcmp.gt.f32.partialorder %v1361, 0.0
      %vm1364 = vcmp.gt.f32.partialorder %v1362, 0.0
      %v1365 = vsel %vm1363, %v1356, -1e+30
      %v1366 = vsel %vm1364, %v1359, -1e+30
      %vm1367 = vcmask 523264
      %v1368 = vsel %vm1367, %v1365, -inf
      %1369 = vmax.xlane.f32.xlu0 %v1368
      %v1370 = vpop.xlane.xlu0 %1369
      %v1371 = vsel %vm1367, %v1366, -inf
      %1372 = vmax.xlane.f32.xlu0 %v1371
      %v1373 = vpop.xlane.xlu0 %1372
      %v1374 = vsub.f32 %v1365, %v1370
      %v1375 = vsub.f32 %v1366, %v1373
      %v1376 = vmul.f32 %v1374, 1.442695
      %v1377 = vpow.pop %v1376
      %v1378 = vmul.f32 %v1375, 1.442695
      %v1379 = vpow.pop %v1378
      %v1380 = vmul.f32 %v1361, %v1377
      %v1381 = vmul.f32 %v1362, %v1379
      %v1382 = vsel %vm1367, %v1380, 0.0
      %1383 = vadd.xlane.f32.xlu0 %v1382
      %v1384 = vpop.xlane.xlu0 %1383
      %v1385 = vsel %vm1367, %v1381, 0.0
      %1386 = vadd.xlane.f32.xlu0 %v1385
      %v1387 = vpop.xlane.xlu0 %1386
      %v1388 = vmax.f32 %v1384, 1e-30
      %v1389 = vmax.f32 %v1387, 1e-30
      %v1390 = vrcp.pop %v1388
      %v1391 = vmul.f32 %v1388, %v1390
      %v1392 = vsub.f32 1.0, %v1391
      %v1393 = vmul.f32 %v1390, %v1392
      %v1394 = vadd.f32 %v1390, %v1393
      %vm1395 = vweird.f32 %v1388
      %vm1396 = vweird.f32 %v1390
      %vm1397 = vmor %vm1395, %vm1396
      %v1398 = vsel %vm1397, %v1390, %v1394
      %v1399 = vand.u32 2147483647, %v1388
      %vm1400 = vcmp.eq.f32.partialorder %v1399, 8.507059e+37
      %v1401 = vand.u32 %v1388, 2147483648
      %v1402 = vor.u32 1.1754944e-38, %v1401
      %v1403 = vsel %vm1400, %v1402, %v1398
      %v1404 = vrcp.pop %v1389
      %v1405 = vmul.f32 %v1389, %v1404
      %v1406 = vsub.f32 1.0, %v1405
      %v1407 = vmul.f32 %v1404, %v1406
      %v1408 = vadd.f32 %v1404, %v1407
      %vm1409 = vweird.f32 %v1389
      %vm1410 = vweird.f32 %v1404
      %vm1411 = vmor %vm1409, %vm1410
      %v1412 = vsel %vm1411, %v1404, %v1408
      %v1413 = vand.u32 2147483647, %v1389
      %vm1414 = vcmp.eq.f32.partialorder %v1413, 8.507059e+37
      %v1415 = vand.u32 %v1389, 2147483648
      %v1416 = vor.u32 1.1754944e-38, %v1415
      %v1417 = vsel %vm1414, %v1416, %v1412
      %v1418 = vmul.f32 %v1380, %v1403
      %v1419 = vmul.f32 %v1381, %v1417
      %v1421 = vsel %vm1367, %v1418, 0
      %v1424 = vsel %vm1367, %v1419, 0
      %1426 = vmatpush.msra.mxu0 0.0
      %1427 = vmatpush.msra.mxu0 0.0
      %1428 = vmatpush.msra.mxu0 0.0
      %1429 = vmatpush.msra.mxu0 0.0
      %1430 = vmatpush.msra.mxu0 0.0
      %1431 = vmatpush.msra.mxu0 0.0
      %1432 = vmatpush.msra.mxu0 0.0
      %1433 = vmatpush.msra.mxu0 0.0
      %1434 = vmatpush.msra.mxu0 %v1313
      %1435 = vmatpush.msra.mxu0 %v1311
      %1436 = vmatpush.msra.mxu0 %v1309
      %1437 = vmatpush.msra.mxu0 %v1307
      %1438 = vmatpush.msra.mxu0 %v1305
      %1439 = vmatpush.msra.mxu0 %v1303
      %1440 = vmatpush.msra.mxu0 %v1301
      %1441 = vmatpush.msra.mxu0 %v1299
      %1442 = vmatmul.f32.gmra.mxu0 %v1421
      %v1443 = vpop.f32.mrf.mxu0
      %v1444 = vadd.f32 %v908, %v1443
      %1445 = vmatmul.f32.gmra.mxu0 %v1424
      %v1446 = vpop.f32.mrf.mxu0
      %v1447 = vadd.f32 %v911, %v1446
      %1448 = vdwg.mxu0
      %1449 = vmatpush.msra.mxu0 0.0
      %1450 = vmatpush.msra.mxu0 0.0
      %1451 = vmatpush.msra.mxu0 0.0
      %1452 = vmatpush.msra.mxu0 0.0
      %1453 = vmatpush.msra.mxu0 0.0
      %1454 = vmatpush.msra.mxu0 0.0
      %1455 = vmatpush.msra.mxu0 0.0
      %1456 = vmatpush.msra.mxu0 0.0
      %1457 = vmatpush.msra.mxu0 %v1314
      %1458 = vmatpush.msra.mxu0 %v1312
      %1459 = vmatpush.msra.mxu0 %v1310
      %1460 = vmatpush.msra.mxu0 %v1308
      %1461 = vmatpush.msra.mxu0 %v1306
      %1462 = vmatpush.msra.mxu0 %v1304
      %1463 = vmatpush.msra.mxu0 %v1302
      %1464 = vmatpush.msra.mxu0 %v1300
      %1465 = vmatmul.f32.gmra.mxu0 %v1421
      %v1466 = vpop.f32.mrf.mxu0
      %v1467 = vadd.f32 %v954, %v1466
      %1468 = vmatmul.f32.gmra.mxu0 %v1424
      %v1469 = vpop.f32.mrf.mxu0
      %v1470 = vadd.f32 %v957, %v1469
      %1471 = vdwg.mxu0
      // Predicated region
      $region53: #{abode_uncond_forward.1} parent=47 // pred_check
        %p1472 = pneg %p301
      $region54: #{abode_uncond_forward.1} parent=47 // pred_check_branch
        %1474 = sbr.rel (%p1472) target = $region56
      $region55: #{abode_uncond_forward.1} parent=47 // pred_region
        %v1475 = vmax.f32 %v1444, 0.0
        %v1476 = vmax.f32 %v1467, 0.0
        %v1477 = vmax.f32 %v1447, 0.0
        %v1478 = vmax.f32 %v1470, 0.0
        %1479 = vst [vmem:[#allocation2] sm:$0xff] %v1475
        %1480 = vst [vmem:[#allocation2 + $0x8] sm:$0xff] %v1476
        %1481 = vst [vmem:[#allocation2 + $0x10] sm:$0xff] %v1477
        %1482 = vst [vmem:[#allocation2 + $0x18] sm:$0xff] %v1478
      $region56: #{abode_uncond_forward.1} parent=47 // pred_fallthru
        _
      %p1483 = scmp.eq.s32.totalorder %s18, 1
      %p1484 = scmp.eq.s32.totalorder %s18, 2
      %p1485 = por %p1483, %p1484
      // Predicated region
      $region57: #{abode_uncond_forward.1} parent=47 // pred_check
        %p1486 = pneg %p1485
      $region58: #{abode_uncond_forward.1} parent=47 // pred_check_branch
        %1488 = sbr.rel (%p1486) target = $region60
      $region59: #{abode_uncond_forward.1} parent=47 // pred_region
        %v1489 = vmul.f32 %v1444, 0.5
        %v1490 = vmul.f32 %v1467, 0.5
        %v1491 = vmul.f32 %v1447, 0.5
        %v1492 = vmul.f32 %v1470, 0.5
        %v1493 = vtanh.pop %v1489
        %v1494 = vtanh.pop %v1490
        %v1495 = vtanh.pop %v1491
        %v1496 = vtanh.pop %v1492
        %v1497 = vadd.f32 %v1493, 1.0
        %v1498 = vadd.f32 %v1494, 1.0
        %v1499 = vadd.f32 %v1495, 1.0
        %v1500 = vadd.f32 %v1496, 1.0
        %v1501 = vmul.f32 %v1497, 0.5
        %v1502 = vmul.f32 %v1498, 0.5
        %v1503 = vmul.f32 %v1499, 0.5
        %v1504 = vmul.f32 %v1500, 0.5
        %1505 = vst [vmem:[#allocation2] sm:$0xff] %v1501
        %1506 = vst [vmem:[#allocation2 + $0x8] sm:$0xff] %v1502
        %1507 = vst [vmem:[#allocation2 + $0x10] sm:$0xff] %v1503
        %1508 = vst [vmem:[#allocation2 + $0x18] sm:$0xff] %v1504
      $region60: #{abode_uncond_forward.1} parent=47 // pred_fallthru
        _
      %p1509 = scmp.eq.s32.totalorder %s18, 3
      // Predicated region
      $region61: #{abode_uncond_forward.1} parent=47 // pred_check
        %p1510 = pneg %p1509
      $region62: #{abode_uncond_forward.1} parent=47 // pred_check_branch
        %1512 = sbr.rel (%p1510) target = $region64
      $region63: #{abode_uncond_forward.1} parent=47 // pred_region
        %1513 = vst [vmem:[#allocation2] sm:$0xff] %v1444
        %1514 = vst [vmem:[#allocation2 + $0x8] sm:$0xff] %v1467
        %1515 = vst [vmem:[#allocation2 + $0x10] sm:$0xff] %v1447
        %1516 = vst [vmem:[#allocation2 + $0x18] sm:$0xff] %v1470
      $region64: #{abode_uncond_forward.1} parent=47 // pred_fallthru
        _
      %v1517 = vld [vmem:[#allocation2] sm:$0xff]
      %v1518 = vld [vmem:[#allocation2 + $0x8] sm:$0xff]
      %v1519 = vld [vmem:[#allocation2 + $0x10] sm:$0xff]
      %v1520 = vld [vmem:[#allocation2 + $0x18] sm:$0xff]
      %1521 = vst [vmem:[%s7] sm:$0xff] %v1517
      %1522 = vst [vmem:[%s7 + $0x8] sm:$0xff] %v1518
      %1523 = vst [vmem:[%s7 + $0x10] sm:$0xff] %v1519
      %1524 = vst [vmem:[%s7 + $0x18] sm:$0xff] %v1520
      // Predicated region
      $region65: #{abode_uncond_forward.1} parent=47 // pred_check
        %p1525 = pneg %p193
      $region66: #{abode_uncond_forward.1} parent=47 // pred_check_branch
        %1527 = sbr.rel (%p1525) target = $region68
      $region67: #{abode_uncond_forward.1} parent=47 // pred_region
        _
      $region68: #{abode_uncond_forward.1} parent=47 // pred_fallthru
        _
      // Predicated region
      $region69: #{abode_uncond_forward.1} parent=47 // pred_check
        %p1528 = pneg %p193
      $region70: #{abode_uncond_forward.1} parent=47 // pred_check_branch
        %1530 = sbr.rel (%p1528) target = $region72
      $region71: #{abode_uncond_forward.1} parent=47 // pred_region
        _
      $region72: #{abode_uncond_forward.1} parent=47 // pred_fallthru
        _
    $region48: #{abode_uncond_forward.1} parent=5 // pred_fallthru
      _
    %p1531 = scmp.le.s32.totalorder 2, %s13
    // Predicated region
    $region73: #{abode_uncond_forward.1} parent=5 // pred_check
      %p1532 = pneg %p1531
    $region74: #{abode_uncond_forward.1} parent=5 // pred_check_branch
      %1534 = sbr.rel (%p1532) target = $region76
    $region75: #{abode_uncond_forward.1} parent=5 // pred_region
      %s1535 = ssub.s32 %s13, 2
    $region76: #{abode_uncond_forward.1} parent=5 // pred_fallthru
      _
  $region6: #{abode_uncond_forward.1} parent=0 // loop_footer
    %s17 = sadd.s32 1, %s13
  $region7: #{abode_uncond_forward.1} parent=0 // loop_footer_branch
    %12 = sbr.rel target = $region3
  $region8: #{abode_uncond_forward.1} parent=0 // loop_exit
    _

</llo_original>
